<compile_context>
chip_gen: v5e
topology: v5e:2x2
jax: 0.10.0
libtpu: 0.0.40
codegen_flags: <defaults>
</compile_context>

<pallas_src>
import functools

import jax
import jax.numpy as jnp
import numpy as np
from jax.experimental import pallas as pl
from jax.experimental.pallas import tpu as pltpu


def _round_up(x, m):
    return (x + m - 1) // m * m


# --------------------- Kernel 1: 1x1 conv (matmul) + folded BN ----------------
def _matmul_bn_kernel(x_ref, w_ref, scale_ref, bias_ref, o_ref):
    # activations cast to bf16 in-kernel (no extra XLA pass), weights arrive bf16 already
    x = x_ref[...].astype(jnp.bfloat16)
    y = jnp.dot(x, w_ref[...], preferred_element_type=jnp.float32)
    y = y * scale_ref[...] + bias_ref[...]          # folded BatchNorm (eval mode)
    o_ref[...] = y.astype(o_ref.dtype)


def matmul_bn(x, w, scale, bias, out_dtype):
    """y[m, n] = (x @ w)[m, n] * scale[n] + bias[n], tiled over (M, Cout); bf16 MXU / f32 acc."""
    m_dim, k_dim = x.shape
    c_out = w.shape[1]
    if m_dim >= 512:
        tm = 512                                    # big row tiles: 1x1 convs are HBM-bound
    elif m_dim >= 256:
        tm = 256
    else:
        tm = _round_up(m_dim, 8)
    tn = 256 if c_out >= 256 else 128               # output last dim >= 128 (unmasked stores)
    m_pad = _round_up(m_dim, tm)
    n_pad = _round_up(c_out, tn)
    if m_pad != m_dim:
        x = jnp.pad(x, ((0, m_pad - m_dim), (0, 0)))
    if n_pad != c_out:
        w = jnp.pad(w, ((0, 0), (0, n_pad - c_out)))
        scale = jnp.pad(scale, (0, n_pad - c_out))
        bias = jnp.pad(bias, (0, n_pad - c_out))
    w = w.astype(jnp.bfloat16)                      # weights are tiny; cast once in the wrapper
    scale2 = scale.reshape(1, n_pad).astype(jnp.float32)
    bias2 = bias.reshape(1, n_pad).astype(jnp.float32)

    grid = (m_pad // tm, n_pad // tn)
    out = pl.pallas_call(
        _matmul_bn_kernel,
        out_shape=jax.ShapeDtypeStruct((m_pad, n_pad), out_dtype),
        grid_spec=pltpu.PrefetchScalarGridSpec(
            num_scalar_prefetch=0,
            grid=grid,
            in_specs=[
                pl.BlockSpec((tm, k_dim), lambda i, j: (i, 0)),
                pl.BlockSpec((k_dim, tn), lambda i, j: (0, j)),
                pl.BlockSpec((1, tn), lambda i, j: (0, j)),
                pl.BlockSpec((1, tn), lambda i, j: (0, j)),
            ],
            out_specs=pl.BlockSpec((tm, tn), lambda i, j: (i, j)),
        ),
        compiler_params=pltpu.CompilerParams(
            dimension_semantics=("parallel", "parallel"),
            vmem_limit_bytes=64 * 1024 * 1024),
        cost_estimate=pl.CostEstimate(
            flops=2 * m_pad * k_dim * n_pad,
            transcendentals=0,
            bytes_accessed=int(m_pad * k_dim * jnp.dtype(x.dtype).itemsize
                               + k_dim * n_pad * 2
                               + m_pad * n_pad * jnp.dtype(out_dtype).itemsize)),
    )(x, w, scale2, bias2)
    return out[:m_dim, :c_out]


# ------------------ Kernel 2: attention, all heads per (batch, q-tile) --------
def _attn_kernel(q_ref, k_ref, v_ref, o_ref, *, num_heads, key_dim, head_dim,
                 scale, n_valid):
    q_all = q_ref[0]                                 # (tq, num_heads*key_dim) query tile
    k_all = k_ref[0]                                 # (Np, num_heads*key_dim) resident keys
    v_all = v_ref[0]                                 # (Np, C)                 resident values
    n_pad = k_all.shape[0]
    if n_pad > n_valid:                              # static: mask padded key columns
        key_id = jax.lax.broadcasted_iota(jnp.int32, (1, n_pad), 1)
        neg = jnp.where(key_id < n_valid, 0.0, -1e30).astype(jnp.float32)
    else:
        neg = None

    outs = []
    for h in range(num_heads):                       # all heads -> one lane-dense (tq, C) store
        q = q_all[:, h * key_dim:(h + 1) * key_dim].astype(jnp.bfloat16)
        k = k_all[:, h * key_dim:(h + 1) * key_dim].astype(jnp.bfloat16)
        v = v_all[:, h * head_dim:(h + 1) * head_dim].astype(jnp.bfloat16)
        # scores[n, m] = sum_d q[n, d] * k[m, d]  (contract key_dim, no explicit transpose)
        s = jax.lax.dot_general(q, k, (((1,), (1,)), ((), ())),
                                preferred_element_type=jnp.float32) * scale
        if neg is not None:
            s = s + neg
        m = jnp.max(s, axis=-1, keepdims=True)
        p = jnp.exp(s - m)
        denom = jnp.sum(p, axis=-1, keepdims=True)
        o = jnp.dot(p.astype(jnp.bfloat16), v, preferred_element_type=jnp.float32)
        outs.append(o * pl.reciprocal(denom, approx=True))
    o_ref[0] = jnp.concatenate(outs, axis=-1).astype(o_ref.dtype)


def attention_heads(q_all, k_all, v_all, num_heads, key_dim, head_dim, scale, out_dtype):
    """q_all/k_all: (B, N, num_heads*key_dim); v_all: (B, N, C) -> (B, N, C) head-major channels."""
    b, n, nhkd = q_all.shape
    c = v_all.shape[-1]
    # q-tile: <=256 rows (keeps v7x 64MiB VMEM happy), multiple of 8; pad N + mask otherwise.
    if n <= 256:
        tq = _round_up(n, 8)
    else:
        tq = 256
    n_pad = _round_up(n, tq)
    if n_pad != n:
        pad = ((0, 0), (0, n_pad - n), (0, 0))
        q_all = jnp.pad(q_all, pad)
        k_all = jnp.pad(k_all, pad)
        v_all = jnp.pad(v_all, pad)

    grid = (b, n_pad // tq)
    kernel = functools.partial(_attn_kernel, num_heads=num_heads, key_dim=key_dim,
                               head_dim=head_dim, scale=scale, n_valid=n)
    out = pl.pallas_call(
        kernel,
        out_shape=jax.ShapeDtypeStruct((b, n_pad, c), out_dtype),
        grid_spec=pltpu.PrefetchScalarGridSpec(
            num_scalar_prefetch=0,
            grid=grid,
            in_specs=[
                pl.BlockSpec((1, tq, nhkd), lambda bi, qi: (bi, qi, 0)),
                pl.BlockSpec((1, n_pad, nhkd), lambda bi, qi: (bi, 0, 0)),
                pl.BlockSpec((1, n_pad, c), lambda bi, qi: (bi, 0, 0)),
            ],
            out_specs=pl.BlockSpec((1, tq, c), lambda bi, qi: (bi, qi, 0)),
        ),
        compiler_params=pltpu.CompilerParams(
            dimension_semantics=("parallel", "parallel"),
            vmem_limit_bytes=64 * 1024 * 1024),
        cost_estimate=pl.CostEstimate(
            flops=2 * b * n_pad * n_pad * num_heads * (key_dim + head_dim),
            transcendentals=b * n_pad * n_pad * num_heads,
            bytes_accessed=int((2 * b * n_pad * nhkd + 2 * b * n_pad * c)
                               * jnp.dtype(q_all.dtype).itemsize)),
    )(q_all, k_all, v_all)
    return out[:, :n, :]


# ------------- Kernel 3: depthwise 3x3 conv + BN + residual add (pe) ----------
def _dw3x3_bn_add_kernel(xp_ref, attn_ref, w_ref, scale_ref, bias_ref, o_ref, *, H, W):
    xp = xp_ref[0].astype(jnp.float32)               # (H+2, W+2, C) zero-padded v image
    wt = w_ref[...].astype(jnp.float32)              # (3, 3, C)
    acc = xp[0:H, 0:W, :] * wt[0, 0, :]
    for kh in range(3):
        for kw in range(3):
            if kh == 0 and kw == 0:
                continue
            acc = acc + xp[kh:kh + H, kw:kw + W, :] * wt[kh, kw, :]
    y = acc * scale_ref[0].astype(jnp.float32) + bias_ref[0].astype(jnp.float32)
    o_ref[0] = (y + attn_ref[0].astype(jnp.float32)).astype(o_ref.dtype)


def dw_conv_bn_add(v_img, attn_img, w_dw, scale, bias, out_dtype):
    b, h, w, c = v_img.shape
    xpad = jnp.pad(v_img, ((0, 0), (1, 1), (1, 1), (0, 0)))
    kernel = functools.partial(_dw3x3_bn_add_kernel, H=h, W=w)
    # TODO(synk): for very large feature maps (v7x, 64 MiB VMEM) tile over rows with a 1-row
    # halo via manual DMA and add a second 'parallel' grid axis; whole-image blocks suffice here.
    return pl.pallas_call(
        kernel,
        out_shape=jax.ShapeDtypeStruct((b, h, w, c), out_dtype),
        grid_spec=pltpu.PrefetchScalarGridSpec(
            num_scalar_prefetch=0,
            grid=(b,),
            in_specs=[
                pl.BlockSpec((1, h + 2, w + 2, c), lambda i: (i, 0, 0, 0)),
                pl.BlockSpec((1, h, w, c), lambda i: (i, 0, 0, 0)),
                pl.BlockSpec((3, 3, c), lambda i: (0, 0, 0)),
                pl.BlockSpec((1, c), lambda i: (0, 0)),
                pl.BlockSpec((1, c), lambda i: (0, 0)),
            ],
            out_specs=pl.BlockSpec((1, h, w, c), lambda i: (i, 0, 0, 0)),
        ),
        compiler_params=pltpu.CompilerParams(dimension_semantics=("parallel",)),
    )(xpad, attn_img, w_dw,
      scale.reshape(1, c).astype(jnp.float32),
      bias.reshape(1, c).astype(jnp.float32))


# --------------------------------- forward ------------------------------------
@functools.partial(jax.jit, static_argnames=("num_heads", "eps"))
def attention_forward(x,
                      qkv_w, qkv_gamma, qkv_beta, qkv_mean, qkv_var,
                      pe_w, pe_gamma, pe_beta, pe_mean, pe_var,
                      proj_w, proj_gamma, proj_beta, proj_mean, proj_var,
                      *, num_heads, eps=1e-3):
    """Ultralytics Attention forward. x: (B, C, H, W) NCHW; returns (B, C, H, W)."""
    b, c, h, w = x.shape
    n = h * w
    hh = qkv_w.shape[0]                              # dim + 2 * num_heads * key_dim
    head_dim = c // num_heads
    key_dim = (hh - c) // (2 * num_heads)
    d_per_head = 2 * key_dim + head_dim
    nhkd = num_heads * key_dim
    scale = float(key_dim) ** -0.5

    def fold(g, be, m, v):
        s = g / jnp.sqrt(v + eps)
        return s, be - m * s

    # Trace-time channel permutation of the qkv conv output:
    # per-head interleaved [q|k|v] -> [Q_all | K_all | V_all], head-major inside each section.
    q_idx = np.concatenate([h_ * d_per_head + np.arange(key_dim) for h_ in range(num_heads)])
    k_idx = q_idx + key_dim
    v_idx = np.concatenate([h_ * d_per_head + 2 * key_dim + np.arange(head_dim)
                            for h_ in range(num_heads)])
    perm = np.concatenate([q_idx, k_idx, v_idx])

    # NCHW -> (B*N, C): channels on the lane axis
    x_flat = jnp.transpose(x, (0, 2, 3, 1)).reshape(b * n, c)

    # qkv = BN(Conv1x1(x)) with permuted output channels (one gridded matmul)
    w_qkv = jnp.transpose(qkv_w.reshape(hh, c)[perm], (1, 0))        # (C, hh)
    s_qkv, b_qkv = fold(qkv_gamma, qkv_beta, qkv_mean, qkv_var)
    qkv_flat = matmul_bn(x_flat, w_qkv, s_qkv[perm], b_qkv[perm], x.dtype)   # (B*N, hh)

    qkv_bnd = qkv_flat.reshape(b, n, hh)
    q_all = qkv_bnd[..., :nhkd]                      # (B, N, nh*kd)   head-major
    k_all = qkv_bnd[..., nhkd:2 * nhkd]              # (B, N, nh*kd)
    v_all = qkv_bnd[..., 2 * nhkd:]                  # (B, N, C) == NCHW v channel order

    # per-head attention, lane-dense (B, N, C) output (no head merge transpose needed)
    attn_img = attention_heads(q_all, k_all, v_all, num_heads, key_dim, head_dim,
                               scale, x.dtype).reshape(b, h, w, c)

    # positional-encoding branch on v, fused with the residual add inside the dw kernel
    v_img = v_all.reshape(b, h, w, c)
    w_pe = jnp.transpose(pe_w.reshape(c, 3, 3), (1, 2, 0))            # (3, 3, C)
    s_pe, b_pe = fold(pe_gamma, pe_beta, pe_mean, pe_var)
    y_img = dw_conv_bn_add(v_img, attn_img, w_pe, s_pe, b_pe, x.dtype)

    # proj = BN(Conv1x1(.))
    w_proj = jnp.transpose(proj_w.reshape(c, c), (1, 0))              # (Cin, Cout)
    s_pr, b_pr = fold(proj_gamma, proj_beta, proj_mean, proj_var)
    out_flat = matmul_bn(y_img.reshape(b * n, c), w_proj, s_pr, b_pr, x.dtype)
    return jnp.transpose(out_flat.reshape(b, h, w, c), (0, 3, 1, 2))


# ------------------------------ plain-JAX reference ---------------------------
def _ref_forward(x,
                 qkv_w, qkv_gamma, qkv_beta, qkv_mean, qkv_var,
                 pe_w, pe_gamma, pe_beta, pe_mean, pe_var,
                 proj_w, proj_gamma, proj_beta, proj_mean, proj_var,
                 num_heads, eps=1e-3):
    b, c, h, w = x.shape
    n = h * w
    hh = qkv_w.shape[0]
    head_dim = c // num_heads
    key_dim = (hh - c) // (2 * num_heads)
    scale = float(key_dim) ** -0.5

    def conv_bn(z, wt, g, be, m, v, pad=0, groups=1):
        y = jax.lax.conv_general_dilated(
            z, wt, (1, 1), ((pad, pad), (pad, pad)),
            dimension_numbers=("NCHW", "OIHW", "NCHW"),
            feature_group_count=groups)
        s = g / jnp.sqrt(v + eps)
        return y * s[None, :, None, None] + (be - m * s)[None, :, None, None]

    qkv = conv_bn(x, qkv_w, qkv_gamma, qkv_beta, qkv_mean, qkv_var)
    qkv = qkv.reshape(b, num_heads, 2 * key_dim + head_dim, n)
    q = qkv[:, :, :key_dim, :]
    k = qkv[:, :, key_dim:2 * key_dim, :]
    v = qkv[:, :, 2 * key_dim:, :]
    attn = jnp.einsum('bhdn,bhdm->bhnm', q, k) * scale
    attn = jax.nn.softmax(attn, axis=-1)
    o = jnp.einsum('bhdm,bhnm->bhdn', v, attn).reshape(b, c, h, w)
    o = o + conv_bn(v.reshape(b, c, h, w), pe_w, pe_gamma, pe_beta, pe_mean, pe_var,
                    pad=1, groups=c)
    return conv_bn(o, proj_w, proj_gamma, proj_beta, proj_mean, proj_var)


if __name__ == "__main__":
    key = jax.random.PRNGKey(0)
    ks = jax.random.split(key, 16)

    B, C, H, W = 2, 64, 8, 8
    num_heads = 2
    head_dim = C // num_heads
    key_dim = head_dim // 2              # attn_ratio = 0.5
    hdim = C + 2 * num_heads * key_dim   # qkv output channels

    x = jax.random.normal(ks[0], (B, C, H, W), jnp.float32)

    qkv_w = jax.random.normal(ks[1], (hdim, C, 1, 1), jnp.float32) * 0.1
    qkv_g = 1.0 + 0.1 * jax.random.normal(ks[2], (hdim,), jnp.float32)
    qkv_b = 0.1 * jax.random.normal(ks[3], (hdim,), jnp.float32)
    qkv_m = 0.1 * jax.random.normal(ks[4], (hdim,), jnp.float32)
    qkv_v = jax.random.uniform(ks[5], (hdim,), jnp.float32, minval=0.5, maxval=1.5)

    pe_w = jax.random.normal(ks[6], (C, 1, 3, 3), jnp.float32) * 0.1
    pe_g = 1.0 + 0.1 * jax.random.normal(ks[7], (C,), jnp.float32)
    pe_b = 0.1 * jax.random.normal(ks[8], (C,), jnp.float32)
    pe_m = 0.1 * jax.random.normal(ks[9], (C,), jnp.float32)
    pe_v = jax.random.uniform(ks[10], (C,), jnp.float32, minval=0.5, maxval=1.5)

    proj_w = jax.random.normal(ks[11], (C, C, 1, 1), jnp.float32) * 0.1
    proj_g = 1.0 + 0.1 * jax.random.normal(ks[12], (C,), jnp.float32)
    proj_b = 0.1 * jax.random.normal(ks[13], (C,), jnp.float32)
    proj_m = 0.1 * jax.random.normal(ks[14], (C,), jnp.float32)
    proj_v = jax.random.uniform(ks[15], (C,), jnp.float32, minval=0.5, maxval=1.5)

    out = attention_forward(
        x,
        qkv_w, qkv_g, qkv_b, qkv_m, qkv_v,
        pe_w, pe_g, pe_b, pe_m, pe_v,
        proj_w, proj_g, proj_b, proj_m, proj_v,
        num_heads=num_heads)
    out = jax.block_until_ready(out)

    ref = _ref_forward(
        x,
        qkv_w, qkv_g, qkv_b, qkv_m, qkv_v,
        pe_w, pe_g, pe_b, pe_m, pe_v,
        proj_w, proj_g, proj_b, proj_m, proj_v,
        num_heads)

    # bf16 MXU operands (qkv, attention, proj) -> relaxed tolerance vs the f32 reference.
    np.testing.assert_allclose(np.asarray(out), np.asarray(ref),
                               rtol=4e-2, atol=4e-2)
    assert out.shape == (B, C, H, W), out.shape
    print("KERNEL_OK")
</pallas_src>

<mosaic_0001>
module attributes {stable_mosaic.version = 11 : i64} {
  func.func @_matmul_bn_kernel(%arg0: i32, %arg1: i32, %arg2: memref<128x64xf32, #tpu.memory_space<vmem>>, %arg3: memref<64x128xbf16, #tpu.memory_space<vmem>>, %arg4: memref<1x128xf32, #tpu.memory_space<vmem>>, %arg5: memref<1x128xf32, #tpu.memory_space<vmem>>, %arg6: memref<128x128xf32, #tpu.memory_space<vmem>>) attributes {dimension_semantics = [#tpu.dimension_semantics<parallel>, #tpu.dimension_semantics<parallel>], iteration_bounds = array<i64: 1, 1>, scalar_prefetch = 0 : i64, scratch_operands = 0 : i64, tpu.core_type = #tpu.core_type<tc>, window_params = [{transform_indices = @transform_0, window_bounds = array<i64: 128, 64>}, {transform_indices = @transform_1, window_bounds = array<i64: 64, 128>}, {transform_indices = @transform_2, window_bounds = array<i64: 1, 128>}, {transform_indices = @transform_3, window_bounds = array<i64: 1, 128>}, {transform_indices = @transform_4, window_bounds = array<i64: 128, 128>}]} {
    %c0 = arith.constant 0 : index
    %c0_0 = arith.constant 0 : index
    %0 = vector.load %arg2[%c0, %c0_0] : memref<128x64xf32, #tpu.memory_space<vmem>>, vector<128x64xf32>
    %1 = arith.truncf %0 : vector<128x64xf32> to vector<128x64xbf16>
    %c0_1 = arith.constant 0 : index
    %c0_2 = arith.constant 0 : index
    %2 = vector.load %arg3[%c0_1, %c0_2] : memref<64x128xbf16, #tpu.memory_space<vmem>>, vector<64x128xbf16>
    %cst = arith.constant dense<0.000000e+00> : vector<128x128xf32>
    %3 = tpu.matmul %1, %2, %cst {dimension_numbers = #tpu.dot_dimension_numbers<[1], [0], [0], [1], [0, 0, 1, 1], [], []>} : vector<128x64xbf16>, vector<64x128xbf16>, vector<128x128xf32> -> vector<128x128xf32>
    %c0_3 = arith.constant 0 : index
    %c0_4 = arith.constant 0 : index
    %4 = vector.load %arg4[%c0_3, %c0_4] : memref<1x128xf32, #tpu.memory_space<vmem>>, vector<1x128xf32>
    %5 = vector.broadcast %4 : vector<1x128xf32> to vector<128x128xf32>
    %6 = arith.mulf %3, %5 : vector<128x128xf32>
    %c0_5 = arith.constant 0 : index
    %c0_6 = arith.constant 0 : index
    %7 = vector.load %arg5[%c0_5, %c0_6] : memref<1x128xf32, #tpu.memory_space<vmem>>, vector<1x128xf32>
    %8 = vector.broadcast %7 : vector<1x128xf32> to vector<128x128xf32>
    %9 = arith.addf %6, %8 : vector<128x128xf32>
    %c0_7 = arith.constant 0 : index
    %c0_8 = arith.constant 0 : index
    %10 = vector.load %arg6[%c0_7, %c0_8] : memref<128x128xf32, #tpu.memory_space<vmem>>, vector<128x128xf32>
    tpu.vector_store %arg6[%c0_7, %c0_8], %9 {strides = array<i32>} : memref<128x128xf32, #tpu.memory_space<vmem>>, vector<128x128xf32>,
    return
  }
  func.func @transform_0(%arg0: i32, %arg1: i32) -> (i32, i32) {
    %c0_i32 = arith.constant 0 : i32
    %c0_i32_0 = arith.constant 0 : i32
    return %arg0, %c0_i32 : i32, i32
  }
  func.func @transform_1(%arg0: i32, %arg1: i32) -> (i32, i32) {
    %c0_i32 = arith.constant 0 : i32
    %c0_i32_0 = arith.constant 0 : i32
    return %c0_i32, %arg1 : i32, i32
  }
  func.func @transform_2(%arg0: i32, %arg1: i32) -> (i32, i32) {
    %c0_i32 = arith.constant 0 : i32
    %c0_i32_0 = arith.constant 0 : i32
    return %c0_i32, %arg1 : i32, i32
  }
  func.func @transform_3(%arg0: i32, %arg1: i32) -> (i32, i32) {
    %c0_i32 = arith.constant 0 : i32
    %c0_i32_0 = arith.constant 0 : i32
    return %c0_i32, %arg1 : i32, i32
  }
  func.func @transform_4(%arg0: i32, %arg1: i32) -> (i32, i32) {
    %c0_i32 = arith.constant 0 : i32
    return %arg0, %arg1 : i32, i32
  }
}

module attributes {stable_mosaic.version = 11 : i64} {
  func.func @_attn_kernel(%arg0: i32, %arg1: i32, %arg2: memref<1x64x32xf32, #tpu.memory_space<vmem>>, %arg3: memref<1x64x32xf32, #tpu.memory_space<vmem>>, %arg4: memref<1x64x64xf32, #tpu.memory_space<vmem>>, %arg5: memref<1x64x64xf32, #tpu.memory_space<vmem>>) attributes {dimension_semantics = [#tpu.dimension_semantics<parallel>, #tpu.dimension_semantics<parallel>], iteration_bounds = array<i64: 2, 1>, scalar_prefetch = 0 : i64, scratch_operands = 0 : i64, tpu.core_type = #tpu.core_type<tc>, window_params = [{transform_indices = @transform_0, window_bounds = array<i64: 1, 64, 32>}, {transform_indices = @transform_1, window_bounds = array<i64: 1, 64, 32>}, {transform_indices = @transform_2, window_bounds = array<i64: 1, 64, 64>}, {transform_indices = @transform_3, window_bounds = array<i64: 1, 64, 64>}]} {
    %c0 = arith.constant 0 : index
    %c0_0 = arith.constant 0 : index
    %c0_1 = arith.constant 0 : index
    %0 = vector.load %arg2[%c0, %c0_0, %c0_1] : memref<1x64x32xf32, #tpu.memory_space<vmem>>, vector<1x64x32xf32>
    %1 = vector.shape_cast %0 : vector<1x64x32xf32> to vector<64x32xf32>
    %c0_2 = arith.constant 0 : index
    %c0_3 = arith.constant 0 : index
    %c0_4 = arith.constant 0 : index
    %2 = vector.load %arg3[%c0_2, %c0_3, %c0_4] : memref<1x64x32xf32, #tpu.memory_space<vmem>>, vector<1x64x32xf32>
    %3 = vector.shape_cast %2 : vector<1x64x32xf32> to vector<64x32xf32>
    %c0_5 = arith.constant 0 : index
    %c0_6 = arith.constant 0 : index
    %c0_7 = arith.constant 0 : index
    %4 = vector.load %arg4[%c0_5, %c0_6, %c0_7] : memref<1x64x64xf32, #tpu.memory_space<vmem>>, vector<1x64x64xf32>
    %5 = vector.shape_cast %4 : vector<1x64x64xf32> to vector<64x64xf32>
    %6 = vector.extract_strided_slice %1 {offsets = [0, 0], sizes = [64, 16], strides = [1, 1]} : vector<64x32xf32> to vector<64x16xf32>
    %7 = arith.truncf %6 : vector<64x16xf32> to vector<64x16xbf16>
    %8 = vector.extract_strided_slice %3 {offsets = [0, 0], sizes = [64, 16], strides = [1, 1]} : vector<64x32xf32> to vector<64x16xf32>
    %9 = arith.truncf %8 : vector<64x16xf32> to vector<64x16xbf16>
    %10 = vector.extract_strided_slice %5 {offsets = [0, 0], sizes = [64, 32], strides = [1, 1]} : vector<64x64xf32> to vector<64x32xf32>
    %11 = arith.truncf %10 : vector<64x32xf32> to vector<64x32xbf16>
    %cst = arith.constant dense<0.000000e+00> : vector<64x64xf32>
    %12 = tpu.matmul %7, %9, %cst {dimension_numbers = #tpu.dot_dimension_numbers<[1], [1], [0], [0], [0, 0, 1, 0], [], []>} : vector<64x16xbf16>, vector<64x16xbf16>, vector<64x64xf32> -> vector<64x64xf32>
    %cst_8 = arith.constant 2.500000e-01 : f32
    %13 = vector.broadcast %cst_8 : f32 to vector<64x64xf32>
    %14 = arith.mulf %12, %13 : vector<64x64xf32>
    %cst_9 = arith.constant dense<0xFF800000> : vector<64xf32>
    %15 = vector.multi_reduction <maximumf>, %14, %cst_9 [1] : vector<64x64xf32> to vector<64xf32>
    %16 = vector.shape_cast %15 : vector<64xf32> to vector<64x1xf32>
    %17 = vector.broadcast %16 : vector<64x1xf32> to vector<64x64xf32>
    %18 = arith.subf %14, %17 : vector<64x64xf32>
    %19 = math.exp %18 : vector<64x64xf32>
    %cst_10 = arith.constant dense<0.000000e+00> : vector<64xf32>
    %20 = vector.multi_reduction <add>, %19, %cst_10 [1] : vector<64x64xf32> to vector<64xf32>
    %21 = vector.shape_cast %20 : vector<64xf32> to vector<64x1xf32>
    %22 = arith.truncf %19 : vector<64x64xf32> to vector<64x64xbf16>
    %cst_11 = arith.constant dense<0.000000e+00> : vector<64x32xf32>
    %23 = tpu.matmul %22, %11, %cst_11 {dimension_numbers = #tpu.dot_dimension_numbers<[1], [0], [0], [1], [0, 0, 1, 1], [], []>} : vector<64x64xbf16>, vector<64x32xbf16>, vector<64x32xf32> -> vector<64x32xf32>
    %24 = tpu.reciprocal %21 {approx = true} : vector<64x1xf32> -> vector<64x1xf32>
    %25 = vector.broadcast %24 : vector<64x1xf32> to vector<64x32xf32>
    %26 = arith.mulf %23, %25 : vector<64x32xf32>
    %27 = vector.extract_strided_slice %1 {offsets = [0, 16], sizes = [64, 16], strides = [1, 1]} : vector<64x32xf32> to vector<64x16xf32>
    %28 = arith.truncf %27 : vector<64x16xf32> to vector<64x16xbf16>
    %29 = vector.extract_strided_slice %3 {offsets = [0, 16], sizes = [64, 16], strides = [1, 1]} : vector<64x32xf32> to vector<64x16xf32>
    %30 = arith.truncf %29 : vector<64x16xf32> to vector<64x16xbf16>
    %31 = vector.extract_strided_slice %5 {offsets = [0, 32], sizes = [64, 32], strides = [1, 1]} : vector<64x64xf32> to vector<64x32xf32>
    %32 = arith.truncf %31 : vector<64x32xf32> to vector<64x32xbf16>
    %cst_12 = arith.constant dense<0.000000e+00> : vector<64x64xf32>
    %33 = tpu.matmul %28, %30, %cst_12 {dimension_numbers = #tpu.dot_dimension_numbers<[1], [1], [0], [0], [0, 0, 1, 0], [], []>} : vector<64x16xbf16>, vector<64x16xbf16>, vector<64x64xf32> -> vector<64x64xf32>
    %cst_13 = arith.constant 2.500000e-01 : f32
    %34 = vector.broadcast %cst_13 : f32 to vector<64x64xf32>
    %35 = arith.mulf %33, %34 : vector<64x64xf32>
    %cst_14 = arith.constant dense<0xFF800000> : vector<64xf32>
    %36 = vector.multi_reduction <maximumf>, %35, %cst_14 [1] : vector<64x64xf32> to vector<64xf32>
    %37 = vector.shape_cast %36 : vector<64xf32> to vector<64x1xf32>
    %38 = vector.broadcast %37 : vector<64x1xf32> to vector<64x64xf32>
    %39 = arith.subf %35, %38 : vector<64x64xf32>
    %40 = math.exp %39 : vector<64x64xf32>
    %cst_15 = arith.constant dense<0.000000e+00> : vector<64xf32>
    %41 = vector.multi_reduction <add>, %40, %cst_15 [1] : vector<64x64xf32> to vector<64xf32>
    %42 = vector.shape_cast %41 : vector<64xf32> to vector<64x1xf32>
    %43 = arith.truncf %40 : vector<64x64xf32> to vector<64x64xbf16>
    %cst_16 = arith.constant dense<0.000000e+00> : vector<64x32xf32>
    %44 = tpu.matmul %43, %32, %cst_16 {dimension_numbers = #tpu.dot_dimension_numbers<[1], [0], [0], [1], [0, 0, 1, 1], [], []>} : vector<64x64xbf16>, vector<64x32xbf16>, vector<64x32xf32> -> vector<64x32xf32>
    %45 = tpu.reciprocal %42 {approx = true} : vector<64x1xf32> -> vector<64x1xf32>
    %46 = vector.broadcast %45 : vector<64x1xf32> to vector<64x32xf32>
    %47 = arith.mulf %44, %46 : vector<64x32xf32>
    %48 = tpu.concatenate %26, %47 in 1 : vector<64x32xf32>, vector<64x32xf32> -> vector<64x64xf32>
    %c0_17 = arith.constant 0 : index
    %c0_18 = arith.constant 0 : index
    %c0_19 = arith.constant 0 : index
    %49 = vector.load %arg5[%c0_17, %c0_18, %c0_19] : memref<1x64x64xf32, #tpu.memory_space<vmem>>, vector<1x64x64xf32>
    %50 = vector.shape_cast %49 : vector<1x64x64xf32> to vector<64x64xf32>
    %51 = vector.shape_cast %48 : vector<64x64xf32> to vector<1x64x64xf32>
    tpu.vector_store %arg5[%c0_17, %c0_18, %c0_19], %51 {strides = array<i32>} : memref<1x64x64xf32, #tpu.memory_space<vmem>>, vector<1x64x64xf32>,
    return
  }
  func.func @transform_0(%arg0: i32, %arg1: i32) -> (i32, i32, i32) {
    %c0_i32 = arith.constant 0 : i32
    %c0_i32_0 = arith.constant 0 : i32
    return %arg0, %arg1, %c0_i32 : i32, i32, i32
  }
  func.func @transform_1(%arg0: i32, %arg1: i32) -> (i32, i32, i32) {
    %c0_i32 = arith.constant 0 : i32
    %c0_i32_0 = arith.constant 0 : i32
    %c0_i32_1 = arith.constant 0 : i32
    return %arg0, %c0_i32, %c0_i32_0 : i32, i32, i32
  }
  func.func @transform_2(%arg0: i32, %arg1: i32) -> (i32, i32, i32) {
    %c0_i32 = arith.constant 0 : i32
    %c0_i32_0 = arith.constant 0 : i32
    %c0_i32_1 = arith.constant 0 : i32
    return %arg0, %c0_i32, %c0_i32_0 : i32, i32, i32
  }
  func.func @transform_3(%arg0: i32, %arg1: i32) -> (i32, i32, i32) {
    %c0_i32 = arith.constant 0 : i32
    %c0_i32_0 = arith.constant 0 : i32
    return %arg0, %arg1, %c0_i32 : i32, i32, i32
  }
}

module attributes {stable_mosaic.version = 11 : i64} {
  func.func @_dw3x3_bn_add_kernel(%arg0: i32, %arg1: memref<1x10x10x64xf32, #tpu.memory_space<vmem>>, %arg2: memref<1x8x8x64xf32, #tpu.memory_space<vmem>>, %arg3: memref<3x3x64xf32, #tpu.memory_space<vmem>>, %arg4: memref<1x64xf32, #tpu.memory_space<vmem>>, %arg5: memref<1x64xf32, #tpu.memory_space<vmem>>, %arg6: memref<1x8x8x64xf32, #tpu.memory_space<vmem>>) attributes {dimension_semantics = [#tpu.dimension_semantics<parallel>], iteration_bounds = array<i64: 2>, scalar_prefetch = 0 : i64, scratch_operands = 0 : i64, tpu.core_type = #tpu.core_type<tc>, window_params = [{transform_indices = @transform_0, window_bounds = array<i64: 1, 10, 10, 64>}, {transform_indices = @transform_1, window_bounds = array<i64: 1, 8, 8, 64>}, {pipeline_mode = #tpu.pipeline_mode<synchronous>, transform_indices = @transform_2, window_bounds = array<i64: 3, 3, 64>}, {pipeline_mode = #tpu.pipeline_mode<synchronous>, transform_indices = @transform_3, window_bounds = array<i64: 1, 64>}, {pipeline_mode = #tpu.pipeline_mode<synchronous>, transform_indices = @transform_4, window_bounds = array<i64: 1, 64>}, {transform_indices = @transform_5, window_bounds = array<i64: 1, 8, 8, 64>}]} {
    %c0 = arith.constant 0 : index
    %c0_0 = arith.constant 0 : index
    %c0_1 = arith.constant 0 : index
    %c0_2 = arith.constant 0 : index
    %0 = vector.load %arg1[%c0, %c0_0, %c0_1, %c0_2] : memref<1x10x10x64xf32, #tpu.memory_space<vmem>>, vector<1x10x10x64xf32>
    %1 = vector.shape_cast %0 : vector<1x10x10x64xf32> to vector<10x10x64xf32>
    %c0_3 = arith.constant 0 : index
    %c0_4 = arith.constant 0 : index
    %c0_5 = arith.constant 0 : index
    %2 = vector.load %arg3[%c0_3, %c0_4, %c0_5] : memref<3x3x64xf32, #tpu.memory_space<vmem>>, vector<3x3x64xf32>
    %3 = vector.extract_strided_slice %1 {offsets = [0, 0, 0], sizes = [8, 8, 64], strides = [1, 1, 1]} : vector<10x10x64xf32> to vector<8x8x64xf32>
    %4 = vector.extract_strided_slice %2 {offsets = [0, 0, 0], sizes = [1, 1, 64], strides = [1, 1, 1]} : vector<3x3x64xf32> to vector<1x1x64xf32>
    %5 = vector.shape_cast %4 : vector<1x1x64xf32> to vector<64xf32>
    %6 = vector.shape_cast %5 : vector<64xf32> to vector<1x1x64xf32>
    %7 = vector.broadcast %6 : vector<1x1x64xf32> to vector<8x8x64xf32>
    %8 = arith.mulf %3, %7 : vector<8x8x64xf32>
    %9 = vector.extract_strided_slice %1 {offsets = [0, 1, 0], sizes = [8, 8, 64], strides = [1, 1, 1]} : vector<10x10x64xf32> to vector<8x8x64xf32>
    %10 = vector.extract_strided_slice %2 {offsets = [0, 1, 0], sizes = [1, 1, 64], strides = [1, 1, 1]} : vector<3x3x64xf32> to vector<1x1x64xf32>
    %11 = vector.shape_cast %10 : vector<1x1x64xf32> to vector<64xf32>
    %12 = vector.shape_cast %11 : vector<64xf32> to vector<1x1x64xf32>
    %13 = vector.broadcast %12 : vector<1x1x64xf32> to vector<8x8x64xf32>
    %14 = arith.mulf %9, %13 : vector<8x8x64xf32>
    %15 = arith.addf %8, %14 : vector<8x8x64xf32>
    %16 = vector.extract_strided_slice %1 {offsets = [0, 2, 0], sizes = [8, 8, 64], strides = [1, 1, 1]} : vector<10x10x64xf32> to vector<8x8x64xf32>
    %17 = vector.extract_strided_slice %2 {offsets = [0, 2, 0], sizes = [1, 1, 64], strides = [1, 1, 1]} : vector<3x3x64xf32> to vector<1x1x64xf32>
    %18 = vector.shape_cast %17 : vector<1x1x64xf32> to vector<64xf32>
    %19 = vector.shape_cast %18 : vector<64xf32> to vector<1x1x64xf32>
    %20 = vector.broadcast %19 : vector<1x1x64xf32> to vector<8x8x64xf32>
    %21 = arith.mulf %16, %20 : vector<8x8x64xf32>
    %22 = arith.addf %15, %21 : vector<8x8x64xf32>
    %23 = vector.extract_strided_slice %1 {offsets = [1, 0, 0], sizes = [8, 8, 64], strides = [1, 1, 1]} : vector<10x10x64xf32> to vector<8x8x64xf32>
    %24 = vector.extract_strided_slice %2 {offsets = [1, 0, 0], sizes = [1, 1, 64], strides = [1, 1, 1]} : vector<3x3x64xf32> to vector<1x1x64xf32>
    %25 = vector.shape_cast %24 : vector<1x1x64xf32> to vector<64xf32>
    %26 = vector.shape_cast %25 : vector<64xf32> to vector<1x1x64xf32>
    %27 = vector.broadcast %26 : vector<1x1x64xf32> to vector<8x8x64xf32>
    %28 = arith.mulf %23, %27 : vector<8x8x64xf32>
    %29 = arith.addf %22, %28 : vector<8x8x64xf32>
    %30 = vector.extract_strided_slice %1 {offsets = [1, 1, 0], sizes = [8, 8, 64], strides = [1, 1, 1]} : vector<10x10x64xf32> to vector<8x8x64xf32>
    %31 = vector.extract_strided_slice %2 {offsets = [1, 1, 0], sizes = [1, 1, 64], strides = [1, 1, 1]} : vector<3x3x64xf32> to vector<1x1x64xf32>
    %32 = vector.shape_cast %31 : vector<1x1x64xf32> to vector<64xf32>
    %33 = vector.shape_cast %32 : vector<64xf32> to vector<1x1x64xf32>
    %34 = vector.broadcast %33 : vector<1x1x64xf32> to vector<8x8x64xf32>
    %35 = arith.mulf %30, %34 : vector<8x8x64xf32>
    %36 = arith.addf %29, %35 : vector<8x8x64xf32>
    %37 = vector.extract_strided_slice %1 {offsets = [1, 2, 0], sizes = [8, 8, 64], strides = [1, 1, 1]} : vector<10x10x64xf32> to vector<8x8x64xf32>
    %38 = vector.extract_strided_slice %2 {offsets = [1, 2, 0], sizes = [1, 1, 64], strides = [1, 1, 1]} : vector<3x3x64xf32> to vector<1x1x64xf32>
    %39 = vector.shape_cast %38 : vector<1x1x64xf32> to vector<64xf32>
    %40 = vector.shape_cast %39 : vector<64xf32> to vector<1x1x64xf32>
    %41 = vector.broadcast %40 : vector<1x1x64xf32> to vector<8x8x64xf32>
    %42 = arith.mulf %37, %41 : vector<8x8x64xf32>
    %43 = arith.addf %36, %42 : vector<8x8x64xf32>
    %44 = vector.extract_strided_slice %1 {offsets = [2, 0, 0], sizes = [8, 8, 64], strides = [1, 1, 1]} : vector<10x10x64xf32> to vector<8x8x64xf32>
    %45 = vector.extract_strided_slice %2 {offsets = [2, 0, 0], sizes = [1, 1, 64], strides = [1, 1, 1]} : vector<3x3x64xf32> to vector<1x1x64xf32>
    %46 = vector.shape_cast %45 : vector<1x1x64xf32> to vector<64xf32>
    %47 = vector.shape_cast %46 : vector<64xf32> to vector<1x1x64xf32>
    %48 = vector.broadcast %47 : vector<1x1x64xf32> to vector<8x8x64xf32>
    %49 = arith.mulf %44, %48 : vector<8x8x64xf32>
    %50 = arith.addf %43, %49 : vector<8x8x64xf32>
    %51 = vector.extract_strided_slice %1 {offsets = [2, 1, 0], sizes = [8, 8, 64], strides = [1, 1, 1]} : vector<10x10x64xf32> to vector<8x8x64xf32>
    %52 = vector.extract_strided_slice %2 {offsets = [2, 1, 0], sizes = [1, 1, 64], strides = [1, 1, 1]} : vector<3x3x64xf32> to vector<1x1x64xf32>
    %53 = vector.shape_cast %52 : vector<1x1x64xf32> to vector<64xf32>
    %54 = vector.shape_cast %53 : vector<64xf32> to vector<1x1x64xf32>
    %55 = vector.broadcast %54 : vector<1x1x64xf32> to vector<8x8x64xf32>
    %56 = arith.mulf %51, %55 : vector<8x8x64xf32>
    %57 = arith.addf %50, %56 : vector<8x8x64xf32>
    %58 = vector.extract_strided_slice %1 {offsets = [2, 2, 0], sizes = [8, 8, 64], strides = [1, 1, 1]} : vector<10x10x64xf32> to vector<8x8x64xf32>
    %59 = vector.extract_strided_slice %2 {offsets = [2, 2, 0], sizes = [1, 1, 64], strides = [1, 1, 1]} : vector<3x3x64xf32> to vector<1x1x64xf32>
    %60 = vector.shape_cast %59 : vector<1x1x64xf32> to vector<64xf32>
    %61 = vector.shape_cast %60 : vector<64xf32> to vector<1x1x64xf32>
    %62 = vector.broadcast %61 : vector<1x1x64xf32> to vector<8x8x64xf32>
    %63 = arith.mulf %58, %62 : vector<8x8x64xf32>
    %64 = arith.addf %57, %63 : vector<8x8x64xf32>
    %c0_6 = arith.constant 0 : index
    %c0_7 = arith.constant 0 : index
    %65 = vector.load %arg4[%c0_6, %c0_7] : memref<1x64xf32, #tpu.memory_space<vmem>>, vector<1x64xf32>
    %66 = vector.shape_cast %65 : vector<1x64xf32> to vector<64xf32>
    %67 = vector.shape_cast %66 : vector<64xf32> to vector<1x1x64xf32>
    %68 = vector.broadcast %67 : vector<1x1x64xf32> to vector<8x8x64xf32>
    %69 = arith.mulf %64, %68 : vector<8x8x64xf32>
    %c0_8 = arith.constant 0 : index
    %c0_9 = arith.constant 0 : index
    %70 = vector.load %arg5[%c0_8, %c0_9] : memref<1x64xf32, #tpu.memory_space<vmem>>, vector<1x64xf32>
    %71 = vector.shape_cast %70 : vector<1x64xf32> to vector<64xf32>
    %72 = vector.shape_cast %71 : vector<64xf32> to vector<1x1x64xf32>
    %73 = vector.broadcast %72 : vector<1x1x64xf32> to vector<8x8x64xf32>
    %74 = arith.addf %69, %73 : vector<8x8x64xf32>
    %c0_10 = arith.constant 0 : index
    %c0_11 = arith.constant 0 : index
    %c0_12 = arith.constant 0 : index
    %c0_13 = arith.constant 0 : index
    %75 = vector.load %arg2[%c0_10, %c0_11, %c0_12, %c0_13] : memref<1x8x8x64xf32, #tpu.memory_space<vmem>>, vector<1x8x8x64xf32>
    %76 = vector.shape_cast %75 : vector<1x8x8x64xf32> to vector<8x8x64xf32>
    %77 = arith.addf %74, %76 : vector<8x8x64xf32>
    %c0_14 = arith.constant 0 : index
    %c0_15 = arith.constant 0 : index
    %c0_16 = arith.constant 0 : index
    %c0_17 = arith.constant 0 : index
    %78 = vector.load %arg6[%c0_14, %c0_15, %c0_16, %c0_17] : memref<1x8x8x64xf32, #tpu.memory_space<vmem>>, vector<1x8x8x64xf32>
    %79 = vector.shape_cast %78 : vector<1x8x8x64xf32> to vector<8x8x64xf32>
    %80 = vector.shape_cast %77 : vector<8x8x64xf32> to vector<1x8x8x64xf32>
    tpu.vector_store %arg6[%c0_14, %c0_15, %c0_16, %c0_17], %80 {strides = array<i32>} : memref<1x8x8x64xf32, #tpu.memory_space<vmem>>, vector<1x8x8x64xf32>,
    return
  }
  func.func @transform_0(%arg0: i32) -> (i32, i32, i32, i32) {
    %c0_i32 = arith.constant 0 : i32
    %c0_i32_0 = arith.constant 0 : i32
    %c0_i32_1 = arith.constant 0 : i32
    %c0_i32_2 = arith.constant 0 : i32
    return %arg0, %c0_i32, %c0_i32_0, %c0_i32_1 : i32, i32, i32, i32
  }
  func.func @transform_1(%arg0: i32) -> (i32, i32, i32, i32) {
    %c0_i32 = arith.constant 0 : i32
    %c0_i32_0 = arith.constant 0 : i32
    %c0_i32_1 = arith.constant 0 : i32
    %c0_i32_2 = arith.constant 0 : i32
    return %arg0, %c0_i32, %c0_i32_0, %c0_i32_1 : i32, i32, i32, i32
  }
  func.func @transform_2(%arg0: i32) -> (i32, i32, i32) {
    %c0_i32 = arith.constant 0 : i32
    %c0_i32_0 = arith.constant 0 : i32
    %c0_i32_1 = arith.constant 0 : i32
    %c0_i32_2 = arith.constant 0 : i32
    return %c0_i32, %c0_i32_0, %c0_i32_1 : i32, i32, i32
  }
  func.func @transform_3(%arg0: i32) -> (i32, i32) {
    %c0_i32 = arith.constant 0 : i32
    %c0_i32_0 = arith.constant 0 : i32
    %c0_i32_1 = arith.constant 0 : i32
    return %c0_i32, %c0_i32_0 : i32, i32
  }
  func.func @transform_4(%arg0: i32) -> (i32, i32) {
    %c0_i32 = arith.constant 0 : i32
    %c0_i32_0 = arith.constant 0 : i32
    %c0_i32_1 = arith.constant 0 : i32
    return %c0_i32, %c0_i32_0 : i32, i32
  }
  func.func @transform_5(%arg0: i32) -> (i32, i32, i32, i32) {
    %c0_i32 = arith.constant 0 : i32
    %c0_i32_0 = arith.constant 0 : i32
    %c0_i32_1 = arith.constant 0 : i32
    %c0_i32_2 = arith.constant 0 : i32
    return %arg0, %c0_i32, %c0_i32_0, %c0_i32_1 : i32, i32, i32, i32
  }
}

module attributes {stable_mosaic.version = 11 : i64} {
  func.func @_matmul_bn_kernel(%arg0: i32, %arg1: i32, %arg2: memref<128x64xf32, #tpu.memory_space<vmem>>, %arg3: memref<64x128xbf16, #tpu.memory_space<vmem>>, %arg4: memref<1x128xf32, #tpu.memory_space<vmem>>, %arg5: memref<1x128xf32, #tpu.memory_space<vmem>>, %arg6: memref<128x128xf32, #tpu.memory_space<vmem>>) attributes {dimension_semantics = [#tpu.dimension_semantics<parallel>, #tpu.dimension_semantics<parallel>], iteration_bounds = array<i64: 1, 1>, scalar_prefetch = 0 : i64, scratch_operands = 0 : i64, tpu.core_type = #tpu.core_type<tc>, window_params = [{transform_indices = @transform_0, window_bounds = array<i64: 128, 64>}, {transform_indices = @transform_1, window_bounds = array<i64: 64, 128>}, {transform_indices = @transform_2, window_bounds = array<i64: 1, 128>}, {transform_indices = @transform_3, window_bounds = array<i64: 1, 128>}, {transform_indices = @transform_4, window_bounds = array<i64: 128, 128>}]} {
    %c0 = arith.constant 0 : index
    %c0_0 = arith.constant 0 : index
    %0 = vector.load %arg2[%c0, %c0_0] : memref<128x64xf32, #tpu.memory_space<vmem>>, vector<128x64xf32>
    %1 = arith.truncf %0 : vector<128x64xf32> to vector<128x64xbf16>
    %c0_1 = arith.constant 0 : index
    %c0_2 = arith.constant 0 : index
    %2 = vector.load %arg3[%c0_1, %c0_2] : memref<64x128xbf16, #tpu.memory_space<vmem>>, vector<64x128xbf16>
    %cst = arith.constant dense<0.000000e+00> : vector<128x128xf32>
    %3 = tpu.matmul %1, %2, %cst {dimension_numbers = #tpu.dot_dimension_numbers<[1], [0], [0], [1], [0, 0, 1, 1], [], []>} : vector<128x64xbf16>, vector<64x128xbf16>, vector<128x128xf32> -> vector<128x128xf32>
    %c0_3 = arith.constant 0 : index
    %c0_4 = arith.constant 0 : index
    %4 = vector.load %arg4[%c0_3, %c0_4] : memref<1x128xf32, #tpu.memory_space<vmem>>, vector<1x128xf32>
    %5 = vector.broadcast %4 : vector<1x128xf32> to vector<128x128xf32>
    %6 = arith.mulf %3, %5 : vector<128x128xf32>
    %c0_5 = arith.constant 0 : index
    %c0_6 = arith.constant 0 : index
    %7 = vector.load %arg5[%c0_5, %c0_6] : memref<1x128xf32, #tpu.memory_space<vmem>>, vector<1x128xf32>
    %8 = vector.broadcast %7 : vector<1x128xf32> to vector<128x128xf32>
    %9 = arith.addf %6, %8 : vector<128x128xf32>
    %c0_7 = arith.constant 0 : index
    %c0_8 = arith.constant 0 : index
    %10 = vector.load %arg6[%c0_7, %c0_8] : memref<128x128xf32, #tpu.memory_space<vmem>>, vector<128x128xf32>
    tpu.vector_store %arg6[%c0_7, %c0_8], %9 {strides = array<i32>} : memref<128x128xf32, #tpu.memory_space<vmem>>, vector<128x128xf32>,
    return
  }
  func.func @transform_0(%arg0: i32, %arg1: i32) -> (i32, i32) {
    %c0_i32 = arith.constant 0 : i32
    %c0_i32_0 = arith.constant 0 : i32
    return %arg0, %c0_i32 : i32, i32
  }
  func.func @transform_1(%arg0: i32, %arg1: i32) -> (i32, i32) {
    %c0_i32 = arith.constant 0 : i32
    %c0_i32_0 = arith.constant 0 : i32
    return %c0_i32, %arg1 : i32, i32
  }
  func.func @transform_2(%arg0: i32, %arg1: i32) -> (i32, i32) {
    %c0_i32 = arith.constant 0 : i32
    %c0_i32_0 = arith.constant 0 : i32
    return %c0_i32, %arg1 : i32, i32
  }
  func.func @transform_3(%arg0: i32, %arg1: i32) -> (i32, i32) {
    %c0_i32 = arith.constant 0 : i32
    %c0_i32_0 = arith.constant 0 : i32
    return %c0_i32, %arg1 : i32, i32
  }
  func.func @transform_4(%arg0: i32, %arg1: i32) -> (i32, i32) {
    %c0_i32 = arith.constant 0 : i32
    return %arg0, %arg1 : i32, i32
  }
}

</mosaic_0001>

<llo_original>
// kernel: attention_forward.5
$region0: #{attention_forward.5}
  #allocation0 [shape = 'u32[]', space=smem, size = 0x4, offset = 0x4, fixed_abs, tag = 'smem constant byte address 0x4 - core index']
  #allocation1 [shape = 'u32[72,128]{1,0:T(1,128)}', space=vmem, size = 0x9000, scoped, tag = 'internal scratch']
  %s0 = inlined_call_operand.vmem [shape: f32[2,64,32], index: 0, kind: input, shape index: {}]
  %s1 = inlined_call_operand.vmem [shape: f32[2,64,32], index: 1, kind: input, shape index: {}]
  %s2 = inlined_call_operand.vmem [shape: f32[2,64,64], index: 2, kind: input, shape index: {}]
  %s3 = inlined_call_operand.vmem [shape: f32[2,64,64], index: 3, kind: output, shape index: {}]
  %s4 = sld [smem:[#allocation0]]
  $region45: #{attention_forward.5} parent=0
    _
  %s6 = ssub.s32 1, %s4
  %s7 = scalar_select 0, %s6, %s4
  loop: start=0, step=1, limit=4
  $region2: #{attention_forward.5} parent=0 // loop_pre_header
    _
  $region3: #{attention_forward.5} parent=0 // loop_header
    %s9 = sphi 0, %s13
    %p10 = scmp.ge.s32.totalorder %s9, 4
    %s16 = sphi 0, %s28
    %s17 = sphi 0, %s24
    %s18 = sphi 0, %s16
    %s19 = sphi 0, %s17
    %s20 = sphi 0, %s18
    %s21 = sphi 0, %s19
    %s33 = sphi 0, %s35
    %s36 = sphi 0, %s33
    %s37 = sphi 0, %s36
    %s53 = sphi 0, %s37
    %s59 = sphi 0, %s61
    %s62 = sphi 0, %s59
    %s63 = sphi 0, %s62
    %s79 = sphi 0, %s63
    %s85 = sphi 0, %s87
    %s88 = sphi 0, %s85
    %s89 = sphi 0, %s88
    %s105 = sphi 0, %s89
    %s113 = sphi 0, %s115
    %s116 = sphi 0, %s113
    %s117 = sphi 0, %s116
    %s133 = sphi 0, %s117
  $region4: #{attention_forward.5} parent=0 // loop_header_branch
    %12 = sbr.rel (%p10) target = $region8
  $region5: #{attention_forward.5} parent=0 // loop_body
    %s14 = ssub.s32 %s9, 1
    %s15 = ssub.s32 %s9, 2
    %s22 = sadd.s32 1, %s17
    %p23 = scmp.ge.s32.totalorder %s22, 1
    %s24 = scalar_select %p23, 0, %s22
    %s25 = sadd.s32 1, %s16
    %s26 = scalar_select %p23, %s25, %s16
    %p27 = scmp.ge.s32.totalorder %s26, 2
    %s28 = scalar_select %p27, 0, %s26
    %s29 = ssub.s32 %s16, %s28
    %s30 = ssub.s32 %s17, %s24
    %s31 = sor.u32 %s29, %s30
    %p32 = scmp.eq.s32.totalorder %s31, 0
    %s34 = sadd.s32 %s33, 1
    %s35 = scalar_select %p32, %s33, %s34
    %p38 = pneg %p32
    %p39 = scmp.eq.s32.totalorder %s9, 1
    %p40 = por %p38, %p39
    %p41 = scmp.ne.s32.totalorder %s33, %s36
    %p42 = scmp.eq.s32.totalorder %s9, 0
    %p43 = por %p41, %p42
    %p44 = scmp.ne.s32.totalorder %s33, %s36
    %p45 = scmp.eq.s32.totalorder %s14, 1
    %p46 = por %p44, %p45
    %p47 = scmp.ne.s32.totalorder %s36, %s37
    %p48 = scmp.eq.s32.totalorder %s14, 0
    %p49 = por %p47, %p48
    %p50 = scmp.ne.s32.totalorder %s36, %s37
    %p51 = scmp.eq.s32.totalorder %s15, 1
    %p52 = por %p50, %p51
    %p54 = scmp.ne.s32.totalorder %s37, %s53
    %p55 = scmp.eq.s32.totalorder %s15, 0
    %p56 = por %p54, %p55
    %s57 = ssub.s32 %s16, %s28
    %p58 = scmp.eq.s32.totalorder %s57, 0
    %s60 = sadd.s32 %s59, 1
    %s61 = scalar_select %p58, %s59, %s60
    %p64 = pneg %p58
    %p65 = scmp.eq.s32.totalorder %s9, 1
    %p66 = por %p64, %p65
    %p67 = scmp.ne.s32.totalorder %s59, %s62
    %p68 = scmp.eq.s32.totalorder %s9, 0
    %p69 = por %p67, %p68
    %p70 = scmp.ne.s32.totalorder %s59, %s62
    %p71 = scmp.eq.s32.totalorder %s14, 1
    %p72 = por %p70, %p71
    %p73 = scmp.ne.s32.totalorder %s62, %s63
    %p74 = scmp.eq.s32.totalorder %s14, 0
    %p75 = por %p73, %p74
    %p76 = scmp.ne.s32.totalorder %s62, %s63
    %p77 = scmp.eq.s32.totalorder %s15, 1
    %p78 = por %p76, %p77
    %p80 = scmp.ne.s32.totalorder %s63, %s79
    %p81 = scmp.eq.s32.totalorder %s15, 0
    %p82 = por %p80, %p81
    %s83 = ssub.s32 %s16, %s28
    %p84 = scmp.eq.s32.totalorder %s83, 0
    %s86 = sadd.s32 %s85, 1
    %s87 = scalar_select %p84, %s85, %s86
    %p90 = pneg %p84
    %p91 = scmp.eq.s32.totalorder %s9, 1
    %p92 = por %p90, %p91
    %p93 = scmp.ne.s32.totalorder %s85, %s88
    %p94 = scmp.eq.s32.totalorder %s9, 0
    %p95 = por %p93, %p94
    %p96 = scmp.ne.s32.totalorder %s85, %s88
    %p97 = scmp.eq.s32.totalorder %s14, 1
    %p98 = por %p96, %p97
    %p99 = scmp.ne.s32.totalorder %s88, %s89
    %p100 = scmp.eq.s32.totalorder %s14, 0
    %p101 = por %p99, %p100
    %p102 = scmp.ne.s32.totalorder %s88, %s89
    %p103 = scmp.eq.s32.totalorder %s15, 1
    %p104 = por %p102, %p103
    %p106 = scmp.ne.s32.totalorder %s89, %s105
    %p107 = scmp.eq.s32.totalorder %s15, 0
    %p108 = por %p106, %p107
    %s109 = ssub.s32 %s16, %s28
    %s110 = ssub.s32 %s17, %s24
    %s111 = sor.u32 %s109, %s110
    %p112 = scmp.eq.s32.totalorder %s111, 0
    %s114 = sadd.s32 %s113, 1
    %s115 = scalar_select %p112, %s113, %s114
    %p118 = pneg %p112
    %p119 = scmp.eq.s32.totalorder %s9, 1
    %p120 = por %p118, %p119
    %p121 = scmp.ne.s32.totalorder %s113, %s116
    %p122 = scmp.eq.s32.totalorder %s9, 0
    %p123 = por %p121, %p122
    %p124 = scmp.ne.s32.totalorder %s113, %s116
    %p125 = scmp.eq.s32.totalorder %s14, 1
    %p126 = por %p124, %p125
    %p127 = scmp.ne.s32.totalorder %s116, %s117
    %p128 = scmp.eq.s32.totalorder %s14, 0
    %p129 = por %p127, %p128
    %p130 = scmp.ne.s32.totalorder %s116, %s117
    %p131 = scmp.eq.s32.totalorder %s15, 1
    %p132 = por %p130, %p131
    %p134 = scmp.ne.s32.totalorder %s117, %s133
    %p135 = scmp.eq.s32.totalorder %s15, 0
    %p136 = por %p134, %p135
    %p137 = scmp.le.s32.totalorder 1, %s9
    %p138 = scmp.lt.s32.totalorder %s9, 3
    %p139 = pnand %p137, %p138
    %p140 = pneg %p139
    // Predicated region
    $region9: #{attention_forward.5} parent=5 // pred_check
      _
    $region10: #{attention_forward.5} parent=5 // pred_check_branch
      %142 = sbr.rel (%p139) target = $region12
    $region11: #{attention_forward.5} parent=5 // pred_region
      %s143 = ssub.s32 %s9, 1
    $region12: #{attention_forward.5} parent=5 // pred_fallthru
      _
    %p144 = scmp.lt.s32.totalorder %s9, 2
    // Predicated region
    $region13: #{attention_forward.5} parent=5 // pred_check
      %p145 = pneg %p144
    $region14: #{attention_forward.5} parent=5 // pred_check_branch
      %147 = sbr.rel (%p145) target = $region16
    $region15: #{attention_forward.5} parent=5 // pred_region
      // Predicated region
      $region17: #{attention_forward.5} parent=15 // pred_check
        %p148 = pneg %p43
      $region18: #{attention_forward.5} parent=15 // pred_check_branch
        %150 = sbr.rel (%p148) target = $region20
      $region19: #{attention_forward.5} parent=15 // pred_region
        %s151 = smul.u32 8, %s17
        %p152 = scmp.lt.s32.totalorder %s16, 1
        %s153 = scalar_select %p152, %s16, 1
        %p154 = scmp.lt.s32.totalorder %s151, 7
        %s155 = scalar_select %p154, %s151, 7
        %s156 = smul.addr %s153, 8
        %s157 = sadd.s32 %s155, %s156
        %s158 = smul.addr %s157, 8
        %s159 = scalar_lea.vmem %s0, %s158
        %s160 = smul.u32 8, %s17
      $region20: #{attention_forward.5} parent=15 // pred_fallthru
        _
      // Predicated region
      $region21: #{attention_forward.5} parent=15 // pred_check
        %p161 = pneg %p69
      $region22: #{attention_forward.5} parent=15 // pred_check_branch
        %163 = sbr.rel (%p161) target = $region24
      $region23: #{attention_forward.5} parent=15 // pred_region
        %p164 = scmp.lt.s32.totalorder %s16, 1
        %s165 = scalar_select %p164, %s16, 1
        %s166 = smul.addr %s165, 8
        %s167 = smul.addr %s166, 8
        %s168 = scalar_lea.vmem %s1, %s167
      $region24: #{attention_forward.5} parent=15 // pred_fallthru
        _
      // Predicated region
      $region25: #{attention_forward.5} parent=15 // pred_check
        %p169 = pneg %p95
      $region26: #{attention_forward.5} parent=15 // pred_check_branch
        %171 = sbr.rel (%p169) target = $region28
      $region27: #{attention_forward.5} parent=15 // pred_region
        %p172 = scmp.lt.s32.totalorder %s16, 1
        %s173 = scalar_select %p172, %s16, 1
        %s174 = smul.addr %s173, 8
        %s175 = smul.addr %s174, 8
        %s176 = scalar_lea.vmem %s2, %s175
      $region28: #{attention_forward.5} parent=15 // pred_fallthru
        _
    $region16: #{attention_forward.5} parent=5 // pred_fallthru
      _
    %p177 = scmp.le.s32.totalorder 1, %s9
    %p178 = scmp.lt.s32.totalorder %s9, 3
    %p179 = pnand %p177, %p178
    %p180 = pneg %p179
    // Predicated region
    $region29: #{attention_forward.5} parent=5 // pred_check
      _
    $region30: #{attention_forward.5} parent=5 // pred_check_branch
      %182 = sbr.rel (%p179) target = $region32
    $region31: #{attention_forward.5} parent=5 // pred_region
      %s183 = ssub.s32 %s9, 1
      %s184 = smul.u32 8, %s19
      %p185 = scmp.lt.s32.totalorder %s18, 1
      %s186 = scalar_select %p185, %s18, 1
      %p187 = scmp.lt.s32.totalorder %s184, 7
      %s188 = scalar_select %p187, %s184, 7
      %s189 = smul.addr %s186, 8
      %s190 = sadd.s32 %s188, %s189
      %s191 = smul.addr %s190, 8
      %s192 = scalar_lea.vmem %s0, %s191
      %p193 = pneg %p49
      %p194 = pneg %p46
      %p195 = scmp.lt.s32.totalorder %s18, 1
      %s196 = scalar_select %p195, %s18, 1
      %s197 = smul.addr %s196, 8
      %s198 = smul.addr %s197, 8
      %s199 = scalar_lea.vmem %s1, %s198
      %p200 = pneg %p75
      %p201 = pneg %p72
      %p202 = scmp.lt.s32.totalorder %s18, 1
      %s203 = scalar_select %p202, %s18, 1
      %s204 = smul.addr %s203, 8
      %s205 = smul.addr %s204, 8
      %s206 = scalar_lea.vmem %s2, %s205
      %p207 = pneg %p101
      %p208 = pneg %p98
      %p209 = pneg %p129
      %p210 = pneg %p126
      %s211 = smul.u32 8, %s19
      %p212 = scmp.lt.s32.totalorder %s18, 1
      %s213 = scalar_select %p212, %s18, 1
      %p214 = scmp.lt.s32.totalorder %s211, 7
      %s215 = scalar_select %p214, %s211, 7
      %s216 = smul.addr %s213, 8
      %s217 = sadd.s32 %s215, %s216
      %s218 = smul.addr %s217, 8
      %s219 = scalar_lea.vmem %s3, %s218
      %s220 = smul.u32 8, %s19
      %p221 = scmp.lt.s32.totalorder %s18, 1
      %s222 = scalar_select %p221, %s18, 1
      %p223 = scmp.lt.s32.totalorder %s220, 7
      %s224 = scalar_select %p223, %s220, 7
      %s225 = smul.addr %s222, 8
      %s226 = sadd.s32 %s224, %s225
      %s227 = smul.addr %s226, 8
      %s228 = scalar_lea.vmem %s0, %s227
      %s229 = smul.u32 8, %s19
      %p230 = scmp.lt.s32.totalorder %s18, 1
      %s231 = scalar_select %p230, %s18, 1
      %s232 = smul.addr %s231, 8
      %s233 = smul.addr %s232, 8
      %s234 = scalar_lea.vmem %s1, %s233
      %p235 = scmp.lt.s32.totalorder %s18, 1
      %s236 = scalar_select %p235, %s18, 1
      %s237 = smul.addr %s236, 8
      %s238 = smul.addr %s237, 8
      %s239 = scalar_lea.vmem %s2, %s238
      %s240 = smul.u32 8, %s19
      %p241 = scmp.lt.s32.totalorder %s18, 1
      %s242 = scalar_select %p241, %s18, 1
      %p243 = scmp.lt.s32.totalorder %s240, 7
      %s244 = scalar_select %p243, %s240, 7
      %s245 = smul.addr %s242, 8
      %s246 = sadd.s32 %s244, %s245
      %s247 = smul.addr %s246, 8
      %s248 = scalar_lea.vmem %s3, %s247
      %s249 = smul.u32 8, %s19
      %v251 = vld [vmem:[%s228] sm:$0xff]
      %v252 = vld [vmem:[%s228 + $0x8] sm:$0xff]
      %v253 = vld [vmem:[%s228 + $0x10] sm:$0xff]
      %v254 = vld [vmem:[%s228 + $0x18] sm:$0xff]
      %v255 = vld [vmem:[%s228 + $0x20] sm:$0xff]
      %v256 = vld [vmem:[%s228 + $0x28] sm:$0xff]
      %v257 = vld [vmem:[%s228 + $0x30] sm:$0xff]
      %v258 = vld [vmem:[%s228 + $0x38] sm:$0xff]
      %v259 = vld [vmem:[%s234] sm:$0xff]
      %v260 = vld [vmem:[%s234 + $0x8] sm:$0xff]
      %v261 = vld [vmem:[%s234 + $0x10] sm:$0xff]
      %v262 = vld [vmem:[%s234 + $0x18] sm:$0xff]
      %v263 = vld [vmem:[%s234 + $0x20] sm:$0xff]
      %v264 = vld [vmem:[%s234 + $0x28] sm:$0xff]
      %v265 = vld [vmem:[%s234 + $0x30] sm:$0xff]
      %v266 = vld [vmem:[%s234 + $0x38] sm:$0xff]
      %v267 = vld [vmem:[%s239] sm:$0xff]
      %v268 = vld [vmem:[%s239 + $0x8] sm:$0xff]
      %v269 = vld [vmem:[%s239 + $0x10] sm:$0xff]
      %v270 = vld [vmem:[%s239 + $0x18] sm:$0xff]
      %v271 = vld [vmem:[%s239 + $0x20] sm:$0xff]
      %v272 = vld [vmem:[%s239 + $0x28] sm:$0xff]
      %v273 = vld [vmem:[%s239 + $0x30] sm:$0xff]
      %v274 = vld [vmem:[%s239 + $0x38] sm:$0xff]
      %v275 = vpack.c.bf16 %v252, %v251
      %v276 = vpack.c.bf16 %v254, %v253
      %v277 = vpack.c.bf16 %v256, %v255
      %v278 = vpack.c.bf16 %v258, %v257
      %v279 = vpack.c.bf16 %v260, %v259
      %v280 = vpack.c.bf16 %v262, %v261
      %v281 = vpack.c.bf16 %v264, %v263
      %v282 = vpack.c.bf16 %v266, %v265
      %v283 = vpack.c.bf16 %v268, %v267
      %v284 = vpack.c.bf16 %v270, %v269
      %v285 = vpack.c.bf16 %v272, %v271
      %v286 = vpack.c.bf16 %v274, %v273
      %vm287 = vcmask 130048
      %v289 = vsel %vm287, %v275, 0
      %v292 = vsel %vm287, %v276, 0
      %v295 = vsel %vm287, %v277, 0
      %v298 = vsel %vm287, %v278, 0
      %v301 = vsel %vm287, %v279, 0
      %v304 = vsel %vm287, %v280, 0
      %v307 = vsel %vm287, %v281, 0
      %v310 = vsel %vm287, %v282, 0
      %312 = vmatpush.bf16.xpose.msra.mxu0 0
      %313 = vmatpush.bf16.xpose.msra.mxu0 0
      %314 = vmatpush.bf16.xpose.msra.mxu0 0
      %315 = vmatpush.bf16.xpose.msra.mxu0 0
      %316 = vmatpush.bf16.xpose.msra.mxu0 %v310
      %317 = vmatpush.bf16.xpose.msra.mxu0 %v307
      %318 = vmatpush.bf16.xpose.msra.mxu0 %v304
      %319 = vmatpush.bf16.xpose.msra.mxu0 %v301
      %320 = vmatmul.bf16.gmra.mxu0 %v289
      %v321 = vpop.f32.mrf.mxu0
      %v322 = vadd.f32 0.0, %v321
      %v323 = vpop.f32.mrf.mxu0
      %v324 = vadd.f32 0.0, %v323
      %325 = vmatmul.bf16.gmra.mxu0 %v292
      %v326 = vpop.f32.mrf.mxu0
      %v327 = vadd.f32 0.0, %v326
      %v328 = vpop.f32.mrf.mxu0
      %v329 = vadd.f32 0.0, %v328
      %330 = vmatmul.bf16.gmra.mxu0 %v295
      %v331 = vpop.f32.mrf.mxu0
      %v332 = vadd.f32 0.0, %v331
      %v333 = vpop.f32.mrf.mxu0
      %v334 = vadd.f32 0.0, %v333
      %335 = vmatmul.bf16.gmra.mxu0 %v298
      %v336 = vpop.f32.mrf.mxu0
      %v337 = vadd.f32 0.0, %v336
      %v338 = vpop.f32.mrf.mxu0
      %v339 = vadd.f32 0.0, %v338
      %340 = vdwg.mxu0
      %v341 = vmul.f32 %v322, 0.25
      %v342 = vmul.f32 %v324, 0.25
      %v343 = vmul.f32 %v327, 0.25
      %v344 = vmul.f32 %v329, 0.25
      %v345 = vmul.f32 %v332, 0.25
      %v346 = vmul.f32 %v334, 0.25
      %v347 = vmul.f32 %v337, 0.25
      %v348 = vmul.f32 %v339, 0.25
      %vm349 = vcmask 523264
      %v350 = vsel %vm349, %v341, -inf
      %351 = vmax.xlane.f32.xlu0 %v350
      %v352 = vpop.xlane.xlu0 %351
      %v353 = vsel %vm349, %v342, -inf
      %354 = vmax.xlane.f32.xlu0 %v353
      %v355 = vpop.xlane.xlu0 %354
      %v356 = vsel %vm349, %v343, -inf
      %357 = vmax.xlane.f32.xlu0 %v356
      %v358 = vpop.xlane.xlu0 %357
      %v359 = vsel %vm349, %v344, -inf
      %360 = vmax.xlane.f32.xlu0 %v359
      %v361 = vpop.xlane.xlu0 %360
      %v362 = vsel %vm349, %v345, -inf
      %363 = vmax.xlane.f32.xlu0 %v362
      %v364 = vpop.xlane.xlu0 %363
      %v365 = vsel %vm349, %v346, -inf
      %366 = vmax.xlane.f32.xlu0 %v365
      %v367 = vpop.xlane.xlu0 %366
      %v368 = vsel %vm349, %v347, -inf
      %369 = vmax.xlane.f32.xlu0 %v368
      %v370 = vpop.xlane.xlu0 %369
      %v371 = vsel %vm349, %v348, -inf
      %372 = vmax.xlane.f32.xlu0 %v371
      %v373 = vpop.xlane.xlu0 %372
      %v374 = vsub.f32 %v341, %v352
      %v375 = vsub.f32 %v342, %v355
      %v376 = vsub.f32 %v343, %v358
      %v377 = vsub.f32 %v344, %v361
      %v378 = vsub.f32 %v345, %v364
      %v379 = vsub.f32 %v346, %v367
      %v380 = vsub.f32 %v347, %v370
      %v381 = vsub.f32 %v348, %v373
      %v382 = vmul.f32 %v374, 1.442695
      %v383 = vpow.pop %v382
      %v384 = vmul.f32 %v375, 1.442695
      %v385 = vpow.pop %v384
      %v386 = vmul.f32 %v376, 1.442695
      %v387 = vpow.pop %v386
      %v388 = vmul.f32 %v377, 1.442695
      %v389 = vpow.pop %v388
      %v390 = vmul.f32 %v378, 1.442695
      %v391 = vpow.pop %v390
      %v392 = vmul.f32 %v379, 1.442695
      %v393 = vpow.pop %v392
      %v394 = vmul.f32 %v380, 1.442695
      %v395 = vpow.pop %v394
      %v396 = vmul.f32 %v381, 1.442695
      %v397 = vpow.pop %v396
      %v398 = vsel %vm349, %v383, 0.0
      %399 = vadd.xlane.f32.xlu0 %v398
      %v400 = vpop.xlane.xlu0 %399
      %v401 = vsel %vm349, %v385, 0.0
      %402 = vadd.xlane.f32.xlu0 %v401
      %v403 = vpop.xlane.xlu0 %402
      %v404 = vsel %vm349, %v387, 0.0
      %405 = vadd.xlane.f32.xlu0 %v404
      %v406 = vpop.xlane.xlu0 %405
      %v407 = vsel %vm349, %v389, 0.0
      %408 = vadd.xlane.f32.xlu0 %v407
      %v409 = vpop.xlane.xlu0 %408
      %v410 = vsel %vm349, %v391, 0.0
      %411 = vadd.xlane.f32.xlu0 %v410
      %v412 = vpop.xlane.xlu0 %411
      %v413 = vsel %vm349, %v393, 0.0
      %414 = vadd.xlane.f32.xlu0 %v413
      %v415 = vpop.xlane.xlu0 %414
      %v416 = vsel %vm349, %v395, 0.0
      %417 = vadd.xlane.f32.xlu0 %v416
      %v418 = vpop.xlane.xlu0 %417
      %v419 = vsel %vm349, %v397, 0.0
      %420 = vadd.xlane.f32.xlu0 %v419
      %v421 = vpop.xlane.xlu0 %420
      %v422 = vpack.c.bf16 %v385, %v383
      %v423 = vpack.c.bf16 %v389, %v387
      %v424 = vpack.c.bf16 %v393, %v391
      %v425 = vpack.c.bf16 %v397, %v395
      %v427 = vsel %vm349, %v422, 0
      %v430 = vsel %vm349, %v423, 0
      %v433 = vsel %vm349, %v424, 0
      %v436 = vsel %vm349, %v425, 0
      %438 = vmatpush.bf16.msra.mxu0 0
      %439 = vmatpush.bf16.msra.mxu0 0
      %440 = vmatpush.bf16.msra.mxu0 0
      %441 = vmatpush.bf16.msra.mxu0 0
      %442 = vmatpush.bf16.msra.mxu0 %v286
      %443 = vmatpush.bf16.msra.mxu0 %v285
      %444 = vmatpush.bf16.msra.mxu0 %v284
      %445 = vmatpush.bf16.msra.mxu0 %v283
      %446 = vmatmul.bf16.gmra.mxu0 %v427
      %v447 = vpop.f32.mrf.mxu0
      %v448 = vadd.f32 0.0, %v447
      %v449 = vpop.f32.mrf.mxu0
      %v450 = vadd.f32 0.0, %v449
      %451 = vmatmul.bf16.gmra.mxu0 %v430
      %v452 = vpop.f32.mrf.mxu0
      %v453 = vadd.f32 0.0, %v452
      %v454 = vpop.f32.mrf.mxu0
      %v455 = vadd.f32 0.0, %v454
      %456 = vmatmul.bf16.gmra.mxu0 %v433
      %v457 = vpop.f32.mrf.mxu0
      %v458 = vadd.f32 0.0, %v457
      %v459 = vpop.f32.mrf.mxu0
      %v460 = vadd.f32 0.0, %v459
      %461 = vmatmul.bf16.gmra.mxu0 %v436
      %v462 = vpop.f32.mrf.mxu0
      %v463 = vadd.f32 0.0, %v462
      %v464 = vpop.f32.mrf.mxu0
      %v465 = vadd.f32 0.0, %v464
      %466 = vdwg.mxu0
      %v467 = vrcp.pop %v400
      %v468 = vrcp.pop %v403
      %v469 = vrcp.pop %v406
      %v470 = vrcp.pop %v409
      %v471 = vrcp.pop %v412
      %v472 = vrcp.pop %v415
      %v473 = vrcp.pop %v418
      %v474 = vrcp.pop %v421
      %v475 = vmul.f32 %v448, %v467
      %v476 = vmul.f32 %v450, %v468
      %v477 = vmul.f32 %v453, %v469
      %v478 = vmul.f32 %v455, %v470
      %v479 = vmul.f32 %v458, %v471
      %v480 = vmul.f32 %v460, %v472
      %v481 = vmul.f32 %v463, %v473
      %v482 = vmul.f32 %v465, %v474
      %487 = vrot.lane.b32.xlu0 %v275, 112
      %v488 = vpop.permute.xlu0 %487
      %489 = vrot.lane.b32.xlu0 %v276, 112
      %v490 = vpop.permute.xlu0 %489
      %491 = vrot.lane.b32.xlu0 %v277, 112
      %v492 = vpop.permute.xlu0 %491
      %493 = vrot.lane.b32.xlu0 %v278, 112
      %v494 = vpop.permute.xlu0 %493
      %499 = vrot.lane.b32.xlu0 %v279, 112
      %v500 = vpop.permute.xlu0 %499
      %501 = vrot.lane.b32.xlu0 %v280, 112
      %v502 = vpop.permute.xlu0 %501
      %503 = vrot.lane.b32.xlu0 %v281, 112
      %v504 = vpop.permute.xlu0 %503
      %505 = vrot.lane.b32.xlu0 %v282, 112
      %v506 = vpop.permute.xlu0 %505
      %v508 = vsel %vm287, %v488, 0
      %v511 = vsel %vm287, %v490, 0
      %v514 = vsel %vm287, %v492, 0
      %v517 = vsel %vm287, %v494, 0
      %v520 = vsel %vm287, %v500, 0
      %v523 = vsel %vm287, %v502, 0
      %v526 = vsel %vm287, %v504, 0
      %v529 = vsel %vm287, %v506, 0
      %531 = vmatpush.bf16.xpose.msra.mxu0 0
      %532 = vmatpush.bf16.xpose.msra.mxu0 0
      %533 = vmatpush.bf16.xpose.msra.mxu0 0
      %534 = vmatpush.bf16.xpose.msra.mxu0 0
      %535 = vmatpush.bf16.xpose.msra.mxu0 %v529
      %536 = vmatpush.bf16.xpose.msra.mxu0 %v526
      %537 = vmatpush.bf16.xpose.msra.mxu0 %v523
      %538 = vmatpush.bf16.xpose.msra.mxu0 %v520
      %539 = vmatmul.bf16.gmra.mxu0 %v508
      %v540 = vpop.f32.mrf.mxu0
      %v541 = vadd.f32 0.0, %v540
      %v542 = vpop.f32.mrf.mxu0
      %v543 = vadd.f32 0.0, %v542
      %544 = vmatmul.bf16.gmra.mxu0 %v511
      %v545 = vpop.f32.mrf.mxu0
      %v546 = vadd.f32 0.0, %v545
      %v547 = vpop.f32.mrf.mxu0
      %v548 = vadd.f32 0.0, %v547
      %549 = vmatmul.bf16.gmra.mxu0 %v514
      %v550 = vpop.f32.mrf.mxu0
      %v551 = vadd.f32 0.0, %v550
      %v552 = vpop.f32.mrf.mxu0
      %v553 = vadd.f32 0.0, %v552
      %554 = vmatmul.bf16.gmra.mxu0 %v517
      %v555 = vpop.f32.mrf.mxu0
      %v556 = vadd.f32 0.0, %v555
      %v557 = vpop.f32.mrf.mxu0
      %v558 = vadd.f32 0.0, %v557
      %559 = vdwg.mxu0
      %v560 = vmul.f32 %v541, 0.25
      %v561 = vmul.f32 %v543, 0.25
      %v562 = vmul.f32 %v546, 0.25
      %v563 = vmul.f32 %v548, 0.25
      %v564 = vmul.f32 %v551, 0.25
      %v565 = vmul.f32 %v553, 0.25
      %v566 = vmul.f32 %v556, 0.25
      %v567 = vmul.f32 %v558, 0.25
      %v568 = vsel %vm349, %v560, -inf
      %569 = vmax.xlane.f32.xlu0 %v568
      %v570 = vpop.xlane.xlu0 %569
      %v571 = vsel %vm349, %v561, -inf
      %572 = vmax.xlane.f32.xlu0 %v571
      %v573 = vpop.xlane.xlu0 %572
      %v574 = vsel %vm349, %v562, -inf
      %575 = vmax.xlane.f32.xlu0 %v574
      %v576 = vpop.xlane.xlu0 %575
      %v577 = vsel %vm349, %v563, -inf
      %578 = vmax.xlane.f32.xlu0 %v577
      %v579 = vpop.xlane.xlu0 %578
      %v580 = vsel %vm349, %v564, -inf
      %581 = vmax.xlane.f32.xlu0 %v580
      %v582 = vpop.xlane.xlu0 %581
      %v583 = vsel %vm349, %v565, -inf
      %584 = vmax.xlane.f32.xlu0 %v583
      %v585 = vpop.xlane.xlu0 %584
      %v586 = vsel %vm349, %v566, -inf
      %587 = vmax.xlane.f32.xlu0 %v586
      %v588 = vpop.xlane.xlu0 %587
      %v589 = vsel %vm349, %v567, -inf
      %590 = vmax.xlane.f32.xlu0 %v589
      %v591 = vpop.xlane.xlu0 %590
      %v592 = vsub.f32 %v560, %v570
      %v593 = vsub.f32 %v561, %v573
      %v594 = vsub.f32 %v562, %v576
      %v595 = vsub.f32 %v563, %v579
      %v596 = vsub.f32 %v564, %v582
      %v597 = vsub.f32 %v565, %v585
      %v598 = vsub.f32 %v566, %v588
      %v599 = vsub.f32 %v567, %v591
      %v600 = vmul.f32 %v592, 1.442695
      %v601 = vpow.pop %v600
      %v602 = vmul.f32 %v593, 1.442695
      %v603 = vpow.pop %v602
      %v604 = vmul.f32 %v594, 1.442695
      %v605 = vpow.pop %v604
      %v606 = vmul.f32 %v595, 1.442695
      %v607 = vpow.pop %v606
      %v608 = vmul.f32 %v596, 1.442695
      %v609 = vpow.pop %v608
      %v610 = vmul.f32 %v597, 1.442695
      %v611 = vpow.pop %v610
      %v612 = vmul.f32 %v598, 1.442695
      %v613 = vpow.pop %v612
      %v614 = vmul.f32 %v599, 1.442695
      %v615 = vpow.pop %v614
      %v616 = vsel %vm349, %v601, 0.0
      %617 = vadd.xlane.f32.xlu0 %v616
      %v618 = vpop.xlane.xlu0 %617
      %v619 = vsel %vm349, %v603, 0.0
      %620 = vadd.xlane.f32.xlu0 %v619
      %v621 = vpop.xlane.xlu0 %620
      %v622 = vsel %vm349, %v605, 0.0
      %623 = vadd.xlane.f32.xlu0 %v622
      %v624 = vpop.xlane.xlu0 %623
      %v625 = vsel %vm349, %v607, 0.0
      %626 = vadd.xlane.f32.xlu0 %v625
      %v627 = vpop.xlane.xlu0 %626
      %v628 = vsel %vm349, %v609, 0.0
      %629 = vadd.xlane.f32.xlu0 %v628
      %v630 = vpop.xlane.xlu0 %629
      %v631 = vsel %vm349, %v611, 0.0
      %632 = vadd.xlane.f32.xlu0 %v631
      %v633 = vpop.xlane.xlu0 %632
      %v634 = vsel %vm349, %v613, 0.0
      %635 = vadd.xlane.f32.xlu0 %v634
      %v636 = vpop.xlane.xlu0 %635
      %v637 = vsel %vm349, %v615, 0.0
      %638 = vadd.xlane.f32.xlu0 %v637
      %v639 = vpop.xlane.xlu0 %638
      %v640 = vpack.c.bf16 %v603, %v601
      %v641 = vpack.c.bf16 %v607, %v605
      %v642 = vpack.c.bf16 %v611, %v609
      %v643 = vpack.c.bf16 %v615, %v613
      %648 = vrot.lane.b32.xlu0 %v283, 96
      %v649 = vpop.permute.xlu0 %648
      %650 = vrot.lane.b32.xlu0 %v284, 96
      %v651 = vpop.permute.xlu0 %650
      %652 = vrot.lane.b32.xlu0 %v285, 96
      %v653 = vpop.permute.xlu0 %652
      %654 = vrot.lane.b32.xlu0 %v286, 96
      %v655 = vpop.permute.xlu0 %654
      %v661 = vsel %vm349, %v640, 0
      %v664 = vsel %vm349, %v641, 0
      %v667 = vsel %vm349, %v642, 0
      %v670 = vsel %vm349, %v643, 0
      %672 = vmatpush.bf16.msra.mxu0 0
      %673 = vmatpush.bf16.msra.mxu0 0
      %674 = vmatpush.bf16.msra.mxu0 0
      %675 = vmatpush.bf16.msra.mxu0 0
      %676 = vmatpush.bf16.msra.mxu0 %v655
      %677 = vmatpush.bf16.msra.mxu0 %v653
      %678 = vmatpush.bf16.msra.mxu0 %v651
      %679 = vmatpush.bf16.msra.mxu0 %v649
      %680 = vmatmul.bf16.gmra.mxu0 %v661
      %v681 = vpop.f32.mrf.mxu0
      %v682 = vadd.f32 0.0, %v681
      %v683 = vpop.f32.mrf.mxu0
      %v684 = vadd.f32 0.0, %v683
      %685 = vmatmul.bf16.gmra.mxu0 %v664
      %v686 = vpop.f32.mrf.mxu0
      %v687 = vadd.f32 0.0, %v686
      %v688 = vpop.f32.mrf.mxu0
      %v689 = vadd.f32 0.0, %v688
      %690 = vmatmul.bf16.gmra.mxu0 %v667
      %v691 = vpop.f32.mrf.mxu0
      %v692 = vadd.f32 0.0, %v691
      %v693 = vpop.f32.mrf.mxu0
      %v694 = vadd.f32 0.0, %v693
      %695 = vmatmul.bf16.gmra.mxu0 %v670
      %v696 = vpop.f32.mrf.mxu0
      %v697 = vadd.f32 0.0, %v696
      %v698 = vpop.f32.mrf.mxu0
      %v699 = vadd.f32 0.0, %v698
      %700 = vdwg.mxu0
      %v701 = vrcp.pop %v618
      %v702 = vrcp.pop %v621
      %v703 = vrcp.pop %v624
      %v704 = vrcp.pop %v627
      %v705 = vrcp.pop %v630
      %v706 = vrcp.pop %v633
      %v707 = vrcp.pop %v636
      %v708 = vrcp.pop %v639
      %v709 = vmul.f32 %v682, %v701
      %v710 = vmul.f32 %v684, %v702
      %v711 = vmul.f32 %v687, %v703
      %v712 = vmul.f32 %v689, %v704
      %v713 = vmul.f32 %v692, %v705
      %v714 = vmul.f32 %v694, %v706
      %v715 = vmul.f32 %v697, %v707
      %v716 = vmul.f32 %v699, %v708
      %725 = vrot.lane.b32.xlu0 %v709, 32
      %v726 = vpop.permute.xlu0 %725
      %727 = vrot.lane.b32.xlu0 %v710, 32
      %v728 = vpop.permute.xlu0 %727
      %729 = vrot.lane.b32.xlu0 %v711, 32
      %v730 = vpop.permute.xlu0 %729
      %731 = vrot.lane.b32.xlu0 %v712, 32
      %v732 = vpop.permute.xlu0 %731
      %733 = vrot.lane.b32.xlu0 %v713, 32
      %v734 = vpop.permute.xlu0 %733
      %735 = vrot.lane.b32.xlu0 %v714, 32
      %v736 = vpop.permute.xlu0 %735
      %737 = vrot.lane.b32.xlu0 %v715, 32
      %v738 = vpop.permute.xlu0 %737
      %739 = vrot.lane.b32.xlu0 %v716, 32
      %v740 = vpop.permute.xlu0 %739
      %vm749 = vcmask 261120
      %v750 = vsel %vm749, %v475, %v726
      %v751 = vsel %vm749, %v476, %v728
      %v752 = vsel %vm749, %v477, %v730
      %v753 = vsel %vm749, %v478, %v732
      %v754 = vsel %vm749, %v479, %v734
      %v755 = vsel %vm749, %v480, %v736
      %v756 = vsel %vm749, %v481, %v738
      %v757 = vsel %vm749, %v482, %v740
      %758 = vst.msk [vmem:[%s248] sm:$0xff] %vm349, %v750
      %759 = vst.msk [vmem:[%s248 + $0x8] sm:$0xff] %vm349, %v751
      %760 = vst.msk [vmem:[%s248 + $0x10] sm:$0xff] %vm349, %v752
      %761 = vst.msk [vmem:[%s248 + $0x18] sm:$0xff] %vm349, %v753
      %762 = vst.msk [vmem:[%s248 + $0x20] sm:$0xff] %vm349, %v754
      %763 = vst.msk [vmem:[%s248 + $0x28] sm:$0xff] %vm349, %v755
      %764 = vst.msk [vmem:[%s248 + $0x30] sm:$0xff] %vm349, %v756
      %765 = vst.msk [vmem:[%s248 + $0x38] sm:$0xff] %vm349, %v757
      %s766 = smul.u32 8, %s19
      %p767 = scmp.lt.s32.totalorder %s18, 1
      %s768 = scalar_select %p767, %s18, 1
      %p769 = scmp.lt.s32.totalorder %s766, 7
      %s770 = scalar_select %p769, %s766, 7
      %s771 = smul.addr %s768, 8
      %s772 = sadd.s32 %s770, %s771
      %s773 = smul.addr %s772, 8
      %s774 = scalar_lea.vmem %s3, %s773
      // Predicated region
      $region33: #{attention_forward.5} parent=31 // pred_check
        %p775 = pneg %p126
      $region34: #{attention_forward.5} parent=31 // pred_check_branch
        %777 = sbr.rel (%p775) target = $region36
      $region35: #{attention_forward.5} parent=31 // pred_region
        %s778 = smul.u32 8, %s19
      $region36: #{attention_forward.5} parent=31 // pred_fallthru
        _
    $region32: #{attention_forward.5} parent=5 // pred_fallthru
      _
    %p779 = scmp.le.s32.totalorder 2, %s9
    // Predicated region
    $region37: #{attention_forward.5} parent=5 // pred_check
      %p780 = pneg %p779
    $region38: #{attention_forward.5} parent=5 // pred_check_branch
      %782 = sbr.rel (%p780) target = $region40
    $region39: #{attention_forward.5} parent=5 // pred_region
      %s783 = ssub.s32 %s9, 2
      // Predicated region
      $region41: #{attention_forward.5} parent=39 // pred_check
        %p784 = pneg %p132
      $region42: #{attention_forward.5} parent=39 // pred_check_branch
        %786 = sbr.rel (%p784) target = $region44
      $region43: #{attention_forward.5} parent=39 // pred_region
        %s787 = smul.u32 8, %s21
        %p788 = scmp.lt.s32.totalorder %s20, 1
        %s789 = scalar_select %p788, %s20, 1
        %p790 = scmp.lt.s32.totalorder %s787, 7
        %s791 = scalar_select %p790, %s787, 7
        %s792 = smul.addr %s789, 8
        %s793 = sadd.s32 %s791, %s792
        %s794 = smul.addr %s793, 8
        %s795 = scalar_lea.vmem %s3, %s794
      $region44: #{attention_forward.5} parent=39 // pred_fallthru
        _
    $region40: #{attention_forward.5} parent=5 // pred_fallthru
      _
  $region6: #{attention_forward.5} parent=0 // loop_footer
    %s13 = sadd.s32 1, %s9
  $region7: #{attention_forward.5} parent=0 // loop_footer_branch
    %8 = sbr.rel target = $region3
  $region8: #{attention_forward.5} parent=0 // loop_exit
    _

// kernel: attention_forward.4
$region0: #{attention_forward.4}
  #allocation0 [shape = 'u32[]', space=smem, size = 0x4, offset = 0x4, fixed_abs, tag = 'smem constant byte address 0x4 - core index']
  #allocation1 [shape = 'u32[72,128]{1,0:T(1,128)}', space=vmem, size = 0x9000, scoped, tag = 'internal scratch']
  %s0 = inlined_call_operand.vmem [shape: f32[128,64], index: 0, kind: input, shape index: {}]
  %s1 = inlined_call_operand.vmem [shape: bf16[64,128], index: 1, kind: input, shape index: {}]
  %s2 = inlined_call_operand.vmem [shape: f32[1,128], index: 2, kind: input, shape index: {}]
  %s3 = inlined_call_operand.vmem [shape: f32[1,128], index: 3, kind: input, shape index: {}]
  %s4 = inlined_call_operand.vmem [shape: f32[128,128], index: 4, kind: output, shape index: {}]
  %s5 = sld [smem:[#allocation0]]
  $region26: #{attention_forward.4} parent=0
    _
  %s7 = ssub.s32 1, %s5
  %s8 = scalar_select 0, %s7, %s5
  // Predicated region
  $region2: #{attention_forward.4} parent=0 // pred_check
    _
  $region3: #{attention_forward.4} parent=0 // pred_check_branch
    %10 = sbr.rel (0) target = $region5
  $region4: #{attention_forward.4} parent=0 // pred_region
    _
  $region5: #{attention_forward.4} parent=0 // pred_fallthru
    _
  // Predicated region
  $region6: #{attention_forward.4} parent=0 // pred_check
    _
  $region7: #{attention_forward.4} parent=0 // pred_check_branch
    %12 = sbr.rel (0) target = $region9
  $region8: #{attention_forward.4} parent=0 // pred_region
    _
  $region9: #{attention_forward.4} parent=0 // pred_fallthru
    _
  // Predicated region
  $region10: #{attention_forward.4} parent=0 // pred_check
    _
  $region11: #{attention_forward.4} parent=0 // pred_check_branch
    %14 = sbr.rel (0) target = $region13
  $region12: #{attention_forward.4} parent=0 // pred_region
    _
  $region13: #{attention_forward.4} parent=0 // pred_fallthru
    _
  // Predicated region
  $region14: #{attention_forward.4} parent=0 // pred_check
    _
  $region15: #{attention_forward.4} parent=0 // pred_check_branch
    %16 = sbr.rel (0) target = $region17
  $region16: #{attention_forward.4} parent=0 // pred_region
    _
  $region17: #{attention_forward.4} parent=0 // pred_fallthru
    _
  %v18 = vld [vmem:[%s0] sm:$0xff]
  %v19 = vld [vmem:[%s0 + $0x8] sm:$0xff]
  %v20 = vld [vmem:[%s0 + $0x10] sm:$0xff]
  %v21 = vld [vmem:[%s0 + $0x18] sm:$0xff]
  %v22 = vld [vmem:[%s0 + $0x20] sm:$0xff]
  %v23 = vld [vmem:[%s0 + $0x28] sm:$0xff]
  %v24 = vld [vmem:[%s0 + $0x30] sm:$0xff]
  %v25 = vld [vmem:[%s0 + $0x38] sm:$0xff]
  %v26 = vld [vmem:[%s0 + $0x40] sm:$0xff]
  %v27 = vld [vmem:[%s0 + $0x48] sm:$0xff]
  %v28 = vld [vmem:[%s0 + $0x50] sm:$0xff]
  %v29 = vld [vmem:[%s0 + $0x58] sm:$0xff]
  %v30 = vld [vmem:[%s0 + $0x60] sm:$0xff]
  %v31 = vld [vmem:[%s0 + $0x68] sm:$0xff]
  %v32 = vld [vmem:[%s0 + $0x70] sm:$0xff]
  %v33 = vld [vmem:[%s0 + $0x78] sm:$0xff]
  %v34 = vpack.c.bf16 %v19, %v18
  %v35 = vpack.c.bf16 %v21, %v20
  %v36 = vpack.c.bf16 %v23, %v22
  %v37 = vpack.c.bf16 %v25, %v24
  %v38 = vpack.c.bf16 %v27, %v26
  %v39 = vpack.c.bf16 %v29, %v28
  %v40 = vpack.c.bf16 %v31, %v30
  %v41 = vpack.c.bf16 %v33, %v32
  %v42 = vld [vmem:[%s1] sm:$0xf]
  %v43 = vld [vmem:[%s1 + $0x4] sm:$0xf]
  %v44 = vld [vmem:[%s1 + $0x8] sm:$0xf]
  %v45 = vld [vmem:[%s1 + $0xc] sm:$0xf]
  %v46 = vld [vmem:[%s1 + $0x10] sm:$0xf]
  %v47 = vld [vmem:[%s1 + $0x14] sm:$0xf]
  %v48 = vld [vmem:[%s1 + $0x18] sm:$0xf]
  %v49 = vld [vmem:[%s1 + $0x1c] sm:$0xf]
  %v58 = vunpack.c.l.b16 %v42
  %v59 = vunpack.c.l.b16 %v43
  %v60 = vunpack.c.l.b16 %v44
  %v61 = vunpack.c.l.b16 %v45
  %v62 = vunpack.c.l.b16 %v46
  %v63 = vunpack.c.l.b16 %v47
  %v64 = vunpack.c.l.b16 %v48
  %v65 = vunpack.c.l.b16 %v49
  %v66 = vpack.c.b16 %v59, %v58
  %v67 = vpack.c.b16 %v61, %v60
  %v68 = vpack.c.b16 %v63, %v62
  %v69 = vpack.c.b16 %v65, %v64
  %vm74 = vcmask 523264
  %v76 = vsel %vm74, %v34, 0
  %v79 = vsel %vm74, %v35, 0
  %v82 = vsel %vm74, %v36, 0
  %v85 = vsel %vm74, %v37, 0
  %v88 = vsel %vm74, %v38, 0
  %v91 = vsel %vm74, %v39, 0
  %v94 = vsel %vm74, %v40, 0
  %v97 = vsel %vm74, %v41, 0
  %99 = vmatpush.bf16.msra.mxu0 0
  %100 = vmatpush.bf16.msra.mxu0 0
  %101 = vmatpush.bf16.msra.mxu0 0
  %102 = vmatpush.bf16.msra.mxu0 0
  %103 = vmatpush.bf16.msra.mxu0 %v69
  %104 = vmatpush.bf16.msra.mxu0 %v68
  %105 = vmatpush.bf16.msra.mxu0 %v67
  %106 = vmatpush.bf16.msra.mxu0 %v66
  %107 = vmatmul.bf16.gmra.mxu0 %v76
  %v108 = vpop.f32.mrf.mxu0
  %v109 = vadd.f32 0.0, %v108
  %v110 = vpop.f32.mrf.mxu0
  %v111 = vadd.f32 0.0, %v110
  %112 = vmatmul.bf16.gmra.mxu0 %v79
  %v113 = vpop.f32.mrf.mxu0
  %v114 = vadd.f32 0.0, %v113
  %v115 = vpop.f32.mrf.mxu0
  %v116 = vadd.f32 0.0, %v115
  %117 = vmatmul.bf16.gmra.mxu0 %v82
  %v118 = vpop.f32.mrf.mxu0
  %v119 = vadd.f32 0.0, %v118
  %v120 = vpop.f32.mrf.mxu0
  %v121 = vadd.f32 0.0, %v120
  %122 = vmatmul.bf16.gmra.mxu0 %v85
  %v123 = vpop.f32.mrf.mxu0
  %v124 = vadd.f32 0.0, %v123
  %v125 = vpop.f32.mrf.mxu0
  %v126 = vadd.f32 0.0, %v125
  %127 = vmatmul.bf16.gmra.mxu0 %v88
  %v128 = vpop.f32.mrf.mxu0
  %v129 = vadd.f32 0.0, %v128
  %v130 = vpop.f32.mrf.mxu0
  %v131 = vadd.f32 0.0, %v130
  %132 = vmatmul.bf16.gmra.mxu0 %v91
  %v133 = vpop.f32.mrf.mxu0
  %v134 = vadd.f32 0.0, %v133
  %v135 = vpop.f32.mrf.mxu0
  %v136 = vadd.f32 0.0, %v135
  %137 = vmatmul.bf16.gmra.mxu0 %v94
  %v138 = vpop.f32.mrf.mxu0
  %v139 = vadd.f32 0.0, %v138
  %v140 = vpop.f32.mrf.mxu0
  %v141 = vadd.f32 0.0, %v140
  %142 = vmatmul.bf16.gmra.mxu0 %v97
  %v143 = vpop.f32.mrf.mxu0
  %v144 = vadd.f32 0.0, %v143
  %v145 = vpop.f32.mrf.mxu0
  %v146 = vadd.f32 0.0, %v145
  %147 = vdwg.mxu0
  %v148 = vld [vmem:[%s2] sm:$0x1]
  %v150 = vperm.slane %v148, 0
  %v152 = vmul.f32 %v109, %v150
  %v153 = vmul.f32 %v111, %v150
  %v154 = vmul.f32 %v114, %v150
  %v155 = vmul.f32 %v116, %v150
  %v156 = vmul.f32 %v119, %v150
  %v157 = vmul.f32 %v121, %v150
  %v158 = vmul.f32 %v124, %v150
  %v159 = vmul.f32 %v126, %v150
  %v160 = vmul.f32 %v129, %v150
  %v161 = vmul.f32 %v131, %v150
  %v162 = vmul.f32 %v134, %v150
  %v163 = vmul.f32 %v136, %v150
  %v164 = vmul.f32 %v139, %v150
  %v165 = vmul.f32 %v141, %v150
  %v166 = vmul.f32 %v144, %v150
  %v167 = vmul.f32 %v146, %v150
  %v168 = vld [vmem:[%s3] sm:$0x1]
  %v170 = vperm.slane %v168, 0
  %v172 = vadd.f32 %v152, %v170
  %v173 = vadd.f32 %v153, %v170
  %v174 = vadd.f32 %v154, %v170
  %v175 = vadd.f32 %v155, %v170
  %v176 = vadd.f32 %v156, %v170
  %v177 = vadd.f32 %v157, %v170
  %v178 = vadd.f32 %v158, %v170
  %v179 = vadd.f32 %v159, %v170
  %v180 = vadd.f32 %v160, %v170
  %v181 = vadd.f32 %v161, %v170
  %v182 = vadd.f32 %v162, %v170
  %v183 = vadd.f32 %v163, %v170
  %v184 = vadd.f32 %v164, %v170
  %v185 = vadd.f32 %v165, %v170
  %v186 = vadd.f32 %v166, %v170
  %v187 = vadd.f32 %v167, %v170
  %188 = vst [vmem:[%s4] sm:$0xff] %v172
  %189 = vst [vmem:[%s4 + $0x8] sm:$0xff] %v173
  %190 = vst [vmem:[%s4 + $0x10] sm:$0xff] %v174
  %191 = vst [vmem:[%s4 + $0x18] sm:$0xff] %v175
  %192 = vst [vmem:[%s4 + $0x20] sm:$0xff] %v176
  %193 = vst [vmem:[%s4 + $0x28] sm:$0xff] %v177
  %194 = vst [vmem:[%s4 + $0x30] sm:$0xff] %v178
  %195 = vst [vmem:[%s4 + $0x38] sm:$0xff] %v179
  %196 = vst [vmem:[%s4 + $0x40] sm:$0xff] %v180
  %197 = vst [vmem:[%s4 + $0x48] sm:$0xff] %v181
  %198 = vst [vmem:[%s4 + $0x50] sm:$0xff] %v182
  %199 = vst [vmem:[%s4 + $0x58] sm:$0xff] %v183
  %200 = vst [vmem:[%s4 + $0x60] sm:$0xff] %v184
  %201 = vst [vmem:[%s4 + $0x68] sm:$0xff] %v185
  %202 = vst [vmem:[%s4 + $0x70] sm:$0xff] %v186
  %203 = vst [vmem:[%s4 + $0x78] sm:$0xff] %v187
  // Predicated region
  $region18: #{attention_forward.4} parent=0 // pred_check
    _
  $region19: #{attention_forward.4} parent=0 // pred_check_branch
    %205 = sbr.rel (0) target = $region21
  $region20: #{attention_forward.4} parent=0 // pred_region
    _
  $region21: #{attention_forward.4} parent=0 // pred_fallthru
    _
  // Predicated region
  $region22: #{attention_forward.4} parent=0 // pred_check
    _
  $region23: #{attention_forward.4} parent=0 // pred_check_branch
    %207 = sbr.rel (0) target = $region25
  $region24: #{attention_forward.4} parent=0 // pred_region
    _
  $region25: #{attention_forward.4} parent=0 // pred_fallthru
    _

// kernel: attention_forward.7
$region0: #{attention_forward.7}
  #allocation0 [shape = 'u32[]', space=smem, size = 0x4, offset = 0x4, fixed_abs, tag = 'smem constant byte address 0x4 - core index']
  #allocation1 [shape = 'u32[72,128]{1,0:T(1,128)}', space=vmem, size = 0x9000, scoped, tag = 'internal scratch']
  %s0 = inlined_call_operand.vmem [shape: f32[128,64], index: 0, kind: input, shape index: {}]
  %s1 = inlined_call_operand.vmem [shape: bf16[64,128], index: 1, kind: input, shape index: {}]
  %s2 = inlined_call_operand.vmem [shape: f32[1,128], index: 2, kind: input, shape index: {}]
  %s3 = inlined_call_operand.vmem [shape: f32[1,128], index: 3, kind: input, shape index: {}]
  %s4 = inlined_call_operand.hbm [shape: f32[128,128], index: 4, kind: output, shape index: {}]
  %s5 = sld [smem:[#allocation0]]
  $region26: #{attention_forward.7} parent=0
    _
  %s7 = ssub.s32 1, %s5
  %s8 = scalar_select 0, %s7, %s5
  $region1: #{attention_forward.7} parent=0
    #allocation2 [shape = 'u8[65536]{0}', space=vmem, size = 0x10000, scoped, tag = 'output window, operand 0, single buffered']
    #allocation3 [shape = 's32[1]{0}', space=sflag, size = 0x4, scoped, tag = 'scoped memory for attention_forward.7']
    %9 = vsyncpa [#allocation3], 0
    // Predicated region
    $region2: #{attention_forward.7} parent=1 // pred_check
      _
    $region3: #{attention_forward.7} parent=1 // pred_check_branch
      %11 = sbr.rel (0) target = $region5
    $region4: #{attention_forward.7} parent=1 // pred_region
      _
    $region5: #{attention_forward.7} parent=1 // pred_fallthru
      _
    // Predicated region
    $region6: #{attention_forward.7} parent=1 // pred_check
      _
    $region7: #{attention_forward.7} parent=1 // pred_check_branch
      %13 = sbr.rel (0) target = $region9
    $region8: #{attention_forward.7} parent=1 // pred_region
      _
    $region9: #{attention_forward.7} parent=1 // pred_fallthru
      _
    // Predicated region
    $region10: #{attention_forward.7} parent=1 // pred_check
      _
    $region11: #{attention_forward.7} parent=1 // pred_check_branch
      %15 = sbr.rel (0) target = $region13
    $region12: #{attention_forward.7} parent=1 // pred_region
      _
    $region13: #{attention_forward.7} parent=1 // pred_fallthru
      _
    // Predicated region
    $region14: #{attention_forward.7} parent=1 // pred_check
      _
    $region15: #{attention_forward.7} parent=1 // pred_check_branch
      %17 = sbr.rel (0) target = $region17
    $region16: #{attention_forward.7} parent=1 // pred_region
      _
    $region17: #{attention_forward.7} parent=1 // pred_fallthru
      _
    %v19 = vld [vmem:[%s0] sm:$0xff]
    %v20 = vld [vmem:[%s0 + $0x8] sm:$0xff]
    %v21 = vld [vmem:[%s0 + $0x10] sm:$0xff]
    %v22 = vld [vmem:[%s0 + $0x18] sm:$0xff]
    %v23 = vld [vmem:[%s0 + $0x20] sm:$0xff]
    %v24 = vld [vmem:[%s0 + $0x28] sm:$0xff]
    %v25 = vld [vmem:[%s0 + $0x30] sm:$0xff]
    %v26 = vld [vmem:[%s0 + $0x38] sm:$0xff]
    %v27 = vld [vmem:[%s0 + $0x40] sm:$0xff]
    %v28 = vld [vmem:[%s0 + $0x48] sm:$0xff]
    %v29 = vld [vmem:[%s0 + $0x50] sm:$0xff]
    %v30 = vld [vmem:[%s0 + $0x58] sm:$0xff]
    %v31 = vld [vmem:[%s0 + $0x60] sm:$0xff]
    %v32 = vld [vmem:[%s0 + $0x68] sm:$0xff]
    %v33 = vld [vmem:[%s0 + $0x70] sm:$0xff]
    %v34 = vld [vmem:[%s0 + $0x78] sm:$0xff]
    %v35 = vpack.c.bf16 %v20, %v19
    %v36 = vpack.c.bf16 %v22, %v21
    %v37 = vpack.c.bf16 %v24, %v23
    %v38 = vpack.c.bf16 %v26, %v25
    %v39 = vpack.c.bf16 %v28, %v27
    %v40 = vpack.c.bf16 %v30, %v29
    %v41 = vpack.c.bf16 %v32, %v31
    %v42 = vpack.c.bf16 %v34, %v33
    %v43 = vld [vmem:[%s1] sm:$0xf]
    %v44 = vld [vmem:[%s1 + $0x4] sm:$0xf]
    %v45 = vld [vmem:[%s1 + $0x8] sm:$0xf]
    %v46 = vld [vmem:[%s1 + $0xc] sm:$0xf]
    %v47 = vld [vmem:[%s1 + $0x10] sm:$0xf]
    %v48 = vld [vmem:[%s1 + $0x14] sm:$0xf]
    %v49 = vld [vmem:[%s1 + $0x18] sm:$0xf]
    %v50 = vld [vmem:[%s1 + $0x1c] sm:$0xf]
    %v59 = vunpack.c.l.b16 %v43
    %v60 = vunpack.c.l.b16 %v44
    %v61 = vunpack.c.l.b16 %v45
    %v62 = vunpack.c.l.b16 %v46
    %v63 = vunpack.c.l.b16 %v47
    %v64 = vunpack.c.l.b16 %v48
    %v65 = vunpack.c.l.b16 %v49
    %v66 = vunpack.c.l.b16 %v50
    %v67 = vpack.c.b16 %v60, %v59
    %v68 = vpack.c.b16 %v62, %v61
    %v69 = vpack.c.b16 %v64, %v63
    %v70 = vpack.c.b16 %v66, %v65
    %vm75 = vcmask 523264
    %v77 = vsel %vm75, %v35, 0
    %v80 = vsel %vm75, %v36, 0
    %v83 = vsel %vm75, %v37, 0
    %v86 = vsel %vm75, %v38, 0
    %v89 = vsel %vm75, %v39, 0
    %v92 = vsel %vm75, %v40, 0
    %v95 = vsel %vm75, %v41, 0
    %v98 = vsel %vm75, %v42, 0
    %100 = vmatpush.bf16.msra.mxu0 0
    %101 = vmatpush.bf16.msra.mxu0 0
    %102 = vmatpush.bf16.msra.mxu0 0
    %103 = vmatpush.bf16.msra.mxu0 0
    %104 = vmatpush.bf16.msra.mxu0 %v70
    %105 = vmatpush.bf16.msra.mxu0 %v69
    %106 = vmatpush.bf16.msra.mxu0 %v68
    %107 = vmatpush.bf16.msra.mxu0 %v67
    %108 = vmatmul.bf16.gmra.mxu0 %v77
    %v109 = vpop.f32.mrf.mxu0
    %v110 = vadd.f32 0.0, %v109
    %v111 = vpop.f32.mrf.mxu0
    %v112 = vadd.f32 0.0, %v111
    %113 = vmatmul.bf16.gmra.mxu0 %v80
    %v114 = vpop.f32.mrf.mxu0
    %v115 = vadd.f32 0.0, %v114
    %v116 = vpop.f32.mrf.mxu0
    %v117 = vadd.f32 0.0, %v116
    %118 = vmatmul.bf16.gmra.mxu0 %v83
    %v119 = vpop.f32.mrf.mxu0
    %v120 = vadd.f32 0.0, %v119
    %v121 = vpop.f32.mrf.mxu0
    %v122 = vadd.f32 0.0, %v121
    %123 = vmatmul.bf16.gmra.mxu0 %v86
    %v124 = vpop.f32.mrf.mxu0
    %v125 = vadd.f32 0.0, %v124
    %v126 = vpop.f32.mrf.mxu0
    %v127 = vadd.f32 0.0, %v126
    %128 = vmatmul.bf16.gmra.mxu0 %v89
    %v129 = vpop.f32.mrf.mxu0
    %v130 = vadd.f32 0.0, %v129
    %v131 = vpop.f32.mrf.mxu0
    %v132 = vadd.f32 0.0, %v131
    %133 = vmatmul.bf16.gmra.mxu0 %v92
    %v134 = vpop.f32.mrf.mxu0
    %v135 = vadd.f32 0.0, %v134
    %v136 = vpop.f32.mrf.mxu0
    %v137 = vadd.f32 0.0, %v136
    %138 = vmatmul.bf16.gmra.mxu0 %v95
    %v139 = vpop.f32.mrf.mxu0
    %v140 = vadd.f32 0.0, %v139
    %v141 = vpop.f32.mrf.mxu0
    %v142 = vadd.f32 0.0, %v141
    %143 = vmatmul.bf16.gmra.mxu0 %v98
    %v144 = vpop.f32.mrf.mxu0
    %v145 = vadd.f32 0.0, %v144
    %v146 = vpop.f32.mrf.mxu0
    %v147 = vadd.f32 0.0, %v146
    %148 = vdwg.mxu0
    %v149 = vld [vmem:[%s2] sm:$0x1]
    %v151 = vperm.slane %v149, 0
    %v153 = vmul.f32 %v110, %v151
    %v154 = vmul.f32 %v112, %v151
    %v155 = vmul.f32 %v115, %v151
    %v156 = vmul.f32 %v117, %v151
    %v157 = vmul.f32 %v120, %v151
    %v158 = vmul.f32 %v122, %v151
    %v159 = vmul.f32 %v125, %v151
    %v160 = vmul.f32 %v127, %v151
    %v161 = vmul.f32 %v130, %v151
    %v162 = vmul.f32 %v132, %v151
    %v163 = vmul.f32 %v135, %v151
    %v164 = vmul.f32 %v137, %v151
    %v165 = vmul.f32 %v140, %v151
    %v166 = vmul.f32 %v142, %v151
    %v167 = vmul.f32 %v145, %v151
    %v168 = vmul.f32 %v147, %v151
    %v169 = vld [vmem:[%s3] sm:$0x1]
    %v171 = vperm.slane %v169, 0
    %v173 = vadd.f32 %v153, %v171
    %v174 = vadd.f32 %v154, %v171
    %v175 = vadd.f32 %v155, %v171
    %v176 = vadd.f32 %v156, %v171
    %v177 = vadd.f32 %v157, %v171
    %v178 = vadd.f32 %v158, %v171
    %v179 = vadd.f32 %v159, %v171
    %v180 = vadd.f32 %v160, %v171
    %v181 = vadd.f32 %v161, %v171
    %v182 = vadd.f32 %v162, %v171
    %v183 = vadd.f32 %v163, %v171
    %v184 = vadd.f32 %v164, %v171
    %v185 = vadd.f32 %v165, %v171
    %v186 = vadd.f32 %v166, %v171
    %v187 = vadd.f32 %v167, %v171
    %v188 = vadd.f32 %v168, %v171
    %189 = vst [vmem:[#allocation2] sm:$0xff] %v173
    %190 = vst [vmem:[#allocation2 + $0x8] sm:$0xff] %v174
    %191 = vst [vmem:[#allocation2 + $0x10] sm:$0xff] %v175
    %192 = vst [vmem:[#allocation2 + $0x18] sm:$0xff] %v176
    %193 = vst [vmem:[#allocation2 + $0x20] sm:$0xff] %v177
    %194 = vst [vmem:[#allocation2 + $0x28] sm:$0xff] %v178
    %195 = vst [vmem:[#allocation2 + $0x30] sm:$0xff] %v179
    %196 = vst [vmem:[#allocation2 + $0x38] sm:$0xff] %v180
    %197 = vst [vmem:[#allocation2 + $0x40] sm:$0xff] %v181
    %198 = vst [vmem:[#allocation2 + $0x48] sm:$0xff] %v182
    %199 = vst [vmem:[#allocation2 + $0x50] sm:$0xff] %v183
    %200 = vst [vmem:[#allocation2 + $0x58] sm:$0xff] %v184
    %201 = vst [vmem:[#allocation2 + $0x60] sm:$0xff] %v185
    %202 = vst [vmem:[#allocation2 + $0x68] sm:$0xff] %v186
    %203 = vst [vmem:[#allocation2 + $0x70] sm:$0xff] %v187
    %204 = vst [vmem:[#allocation2 + $0x78] sm:$0xff] %v188
    // Predicated region
    $region18: #{attention_forward.7} parent=1 // pred_check
      _
    $region19: #{attention_forward.7} parent=1 // pred_check_branch
      %206 = sbr.rel (0) target = $region21
    $region20: #{attention_forward.7} parent=1 // pred_region
      %208 = vsyncadd [#allocation3], 0
      %s209 = sshll.u32 [#allocation2], 4
      %s210 = int_to_ptr.vmem [resolvable:$true] %s209
      %s211 = sshll.u32 %s4, 4
      %s212 = int_to_ptr.hbm [resolvable:$true] %s211
      %217 = dma.vmem_to_hbm [thread:$0]  %s210, 2048, %s212, [#allocation3], 128, 128, 8
    $region21: #{attention_forward.7} parent=1 // pred_fallthru
      _
    // Predicated region
    $region22: #{attention_forward.7} parent=1 // pred_check
      _
    $region23: #{attention_forward.7} parent=1 // pred_check_branch
      %219 = sbr.rel (0) target = $region25
    $region24: #{attention_forward.7} parent=1 // pred_region
      %221 = dma.done [#allocation3], 2048
    $region25: #{attention_forward.7} parent=1 // pred_fallthru
      _
    %222 = vsyncpa [#allocation3], 1

// kernel: attention_forward.6
$region0: #{attention_forward.6}
  #allocation0 [shape = 'u32[]', space=smem, size = 0x4, offset = 0x4, fixed_abs, tag = 'smem constant byte address 0x4 - core index']
  #allocation1 [shape = 'u32[72,128]{1,0:T(1,128)}', space=vmem, size = 0x9000, scoped, tag = 'internal scratch']
  %s0 = inlined_call_operand.vmem [shape: f32[2,10,10,64], index: 0, kind: input, shape index: {}]
  %s1 = inlined_call_operand.vmem [shape: f32[2,8,8,64], index: 1, kind: input, shape index: {}]
  %s2 = inlined_call_operand.vmem [shape: f32[3,3,64], index: 2, kind: input, shape index: {}]
  %s3 = inlined_call_operand.vmem [shape: f32[1,64], index: 3, kind: input, shape index: {}]
  %s4 = inlined_call_operand.vmem [shape: f32[1,64], index: 4, kind: input, shape index: {}]
  %s5 = inlined_call_operand.vmem [shape: f32[2,8,8,64], index: 5, kind: output, shape index: {}]
  %s6 = sld [smem:[#allocation0]]
  $region53: #{attention_forward.6} parent=0
    _
  %s8 = ssub.s32 1, %s6
  %s9 = scalar_select 0, %s8, %s6
  loop: start=0, step=1, limit=4
  $region2: #{attention_forward.6} parent=0 // loop_pre_header
    _
  $region3: #{attention_forward.6} parent=0 // loop_header
    %s11 = sphi 0, %s15
    %p12 = scmp.ge.s32.totalorder %s11, 4
    %s21 = sphi 0, %s23
    %s24 = sphi 0, %s21
    %s25 = sphi 0, %s24
    %s41 = sphi 0, %s25
    %s47 = sphi 0, %s49
    %s50 = sphi 0, %s47
    %s51 = sphi 0, %s50
    %s67 = sphi 0, %s51
    %s71 = sphi 0, %s71
    %s73 = sphi 0, %s71
    %s74 = sphi 0, %s73
    %s88 = sphi 0, %s74
    %s92 = sphi 0, %s92
    %s94 = sphi 0, %s92
    %s95 = sphi 0, %s94
    %s109 = sphi 0, %s95
    %s113 = sphi 0, %s113
    %s115 = sphi 0, %s113
    %s116 = sphi 0, %s115
    %s130 = sphi 0, %s116
    %s136 = sphi 0, %s138
    %s139 = sphi 0, %s136
    %s140 = sphi 0, %s139
    %s156 = sphi 0, %s140
  $region4: #{attention_forward.6} parent=0 // loop_header_branch
    %14 = sbr.rel (%p12) target = $region8
  $region5: #{attention_forward.6} parent=0 // loop_body
    %s16 = ssub.s32 %s11, 1
    %s17 = ssub.s32 %s11, 2
    %s18 = sadd.s32 %s11, 1
    %s19 = ssub.s32 %s11, %s18
    %p20 = scmp.eq.s32.totalorder %s19, 0
    %s22 = sadd.s32 %s21, 1
    %s23 = scalar_select %p20, %s21, %s22
    %p26 = pneg %p20
    %p27 = scmp.eq.s32.totalorder %s11, 1
    %p28 = por %p26, %p27
    %p29 = scmp.ne.s32.totalorder %s21, %s24
    %p30 = scmp.eq.s32.totalorder %s11, 0
    %p31 = por %p29, %p30
    %p32 = scmp.ne.s32.totalorder %s21, %s24
    %p33 = scmp.eq.s32.totalorder %s16, 1
    %p34 = por %p32, %p33
    %p35 = scmp.ne.s32.totalorder %s24, %s25
    %p36 = scmp.eq.s32.totalorder %s16, 0
    %p37 = por %p35, %p36
    %p38 = scmp.ne.s32.totalorder %s24, %s25
    %p39 = scmp.eq.s32.totalorder %s17, 1
    %p40 = por %p38, %p39
    %p42 = scmp.ne.s32.totalorder %s25, %s41
    %p43 = scmp.eq.s32.totalorder %s17, 0
    %p44 = por %p42, %p43
    %s45 = ssub.s32 %s11, %s18
    %p46 = scmp.eq.s32.totalorder %s45, 0
    %s48 = sadd.s32 %s47, 1
    %s49 = scalar_select %p46, %s47, %s48
    %p52 = pneg %p46
    %p53 = scmp.eq.s32.totalorder %s11, 1
    %p54 = por %p52, %p53
    %p55 = scmp.ne.s32.totalorder %s47, %s50
    %p56 = scmp.eq.s32.totalorder %s11, 0
    %p57 = por %p55, %p56
    %p58 = scmp.ne.s32.totalorder %s47, %s50
    %p59 = scmp.eq.s32.totalorder %s16, 1
    %p60 = por %p58, %p59
    %p61 = scmp.ne.s32.totalorder %s50, %s51
    %p62 = scmp.eq.s32.totalorder %s16, 0
    %p63 = por %p61, %p62
    %p64 = scmp.ne.s32.totalorder %s50, %s51
    %p65 = scmp.eq.s32.totalorder %s17, 1
    %p66 = por %p64, %p65
    %p68 = scmp.ne.s32.totalorder %s51, %s67
    %p69 = scmp.eq.s32.totalorder %s17, 0
    %p70 = por %p68, %p69
    %s72 = sadd.s32 %s71, 1
    %p75 = scmp.eq.s32.totalorder %s11, 1
    %p76 = scmp.ne.s32.totalorder %s71, %s73
    %p77 = scmp.eq.s32.totalorder %s11, 0
    %p78 = por %p76, %p77
    %p79 = scmp.ne.s32.totalorder %s71, %s73
    %p80 = scmp.eq.s32.totalorder %s16, 1
    %p81 = por %p79, %p80
    %p82 = scmp.ne.s32.totalorder %s73, %s74
    %p83 = scmp.eq.s32.totalorder %s16, 0
    %p84 = por %p82, %p83
    %p85 = scmp.ne.s32.totalorder %s73, %s74
    %p86 = scmp.eq.s32.totalorder %s17, 1
    %p87 = por %p85, %p86
    %p89 = scmp.ne.s32.totalorder %s74, %s88
    %p90 = scmp.eq.s32.totalorder %s17, 0
    %p91 = por %p89, %p90
    %s93 = sadd.s32 %s92, 1
    %p96 = scmp.eq.s32.totalorder %s11, 1
    %p97 = scmp.ne.s32.totalorder %s92, %s94
    %p98 = scmp.eq.s32.totalorder %s11, 0
    %p99 = por %p97, %p98
    %p100 = scmp.ne.s32.totalorder %s92, %s94
    %p101 = scmp.eq.s32.totalorder %s16, 1
    %p102 = por %p100, %p101
    %p103 = scmp.ne.s32.totalorder %s94, %s95
    %p104 = scmp.eq.s32.totalorder %s16, 0
    %p105 = por %p103, %p104
    %p106 = scmp.ne.s32.totalorder %s94, %s95
    %p107 = scmp.eq.s32.totalorder %s17, 1
    %p108 = por %p106, %p107
    %p110 = scmp.ne.s32.totalorder %s95, %s109
    %p111 = scmp.eq.s32.totalorder %s17, 0
    %p112 = por %p110, %p111
    %s114 = sadd.s32 %s113, 1
    %p117 = scmp.eq.s32.totalorder %s11, 1
    %p118 = scmp.ne.s32.totalorder %s113, %s115
    %p119 = scmp.eq.s32.totalorder %s11, 0
    %p120 = por %p118, %p119
    %p121 = scmp.ne.s32.totalorder %s113, %s115
    %p122 = scmp.eq.s32.totalorder %s16, 1
    %p123 = por %p121, %p122
    %p124 = scmp.ne.s32.totalorder %s115, %s116
    %p125 = scmp.eq.s32.totalorder %s16, 0
    %p126 = por %p124, %p125
    %p127 = scmp.ne.s32.totalorder %s115, %s116
    %p128 = scmp.eq.s32.totalorder %s17, 1
    %p129 = por %p127, %p128
    %p131 = scmp.ne.s32.totalorder %s116, %s130
    %p132 = scmp.eq.s32.totalorder %s17, 0
    %p133 = por %p131, %p132
    %s134 = ssub.s32 %s11, %s18
    %p135 = scmp.eq.s32.totalorder %s134, 0
    %s137 = sadd.s32 %s136, 1
    %s138 = scalar_select %p135, %s136, %s137
    %p141 = pneg %p135
    %p142 = scmp.eq.s32.totalorder %s11, 1
    %p143 = por %p141, %p142
    %p144 = scmp.ne.s32.totalorder %s136, %s139
    %p145 = scmp.eq.s32.totalorder %s11, 0
    %p146 = por %p144, %p145
    %p147 = scmp.ne.s32.totalorder %s136, %s139
    %p148 = scmp.eq.s32.totalorder %s16, 1
    %p149 = por %p147, %p148
    %p150 = scmp.ne.s32.totalorder %s139, %s140
    %p151 = scmp.eq.s32.totalorder %s16, 0
    %p152 = por %p150, %p151
    %p153 = scmp.ne.s32.totalorder %s139, %s140
    %p154 = scmp.eq.s32.totalorder %s17, 1
    %p155 = por %p153, %p154
    %p157 = scmp.ne.s32.totalorder %s140, %s156
    %p158 = scmp.eq.s32.totalorder %s17, 0
    %p159 = por %p157, %p158
    %p160 = scmp.le.s32.totalorder 1, %s11
    %p161 = scmp.lt.s32.totalorder %s11, 3
    %p162 = pnand %p160, %p161
    %p163 = pneg %p162
    // Predicated region
    $region9: #{attention_forward.6} parent=5 // pred_check
      _
    $region10: #{attention_forward.6} parent=5 // pred_check_branch
      %165 = sbr.rel (%p162) target = $region12
    $region11: #{attention_forward.6} parent=5 // pred_region
      %s166 = ssub.s32 %s11, 1
      // Predicated region
      $region13: #{attention_forward.6} parent=11 // pred_check
        %p167 = pneg %p84
      $region14: #{attention_forward.6} parent=11 // pred_check_branch
        %169 = sbr.rel (%p167) target = $region16
      $region15: #{attention_forward.6} parent=11 // pred_region
        _
      $region16: #{attention_forward.6} parent=11 // pred_fallthru
        _
      // Predicated region
      $region17: #{attention_forward.6} parent=11 // pred_check
        %p170 = pneg %p105
      $region18: #{attention_forward.6} parent=11 // pred_check_branch
        %172 = sbr.rel (%p170) target = $region20
      $region19: #{attention_forward.6} parent=11 // pred_region
        _
      $region20: #{attention_forward.6} parent=11 // pred_fallthru
        _
      // Predicated region
      $region21: #{attention_forward.6} parent=11 // pred_check
        %p173 = pneg %p126
      $region22: #{attention_forward.6} parent=11 // pred_check_branch
        %175 = sbr.rel (%p173) target = $region24
      $region23: #{attention_forward.6} parent=11 // pred_region
        _
      $region24: #{attention_forward.6} parent=11 // pred_fallthru
        _
    $region12: #{attention_forward.6} parent=5 // pred_fallthru
      _
    %p176 = scmp.lt.s32.totalorder %s11, 2
    // Predicated region
    $region25: #{attention_forward.6} parent=5 // pred_check
      %p177 = pneg %p176
    $region26: #{attention_forward.6} parent=5 // pred_check_branch
      %179 = sbr.rel (%p177) target = $region28
    $region27: #{attention_forward.6} parent=5 // pred_region
      // Predicated region
      $region29: #{attention_forward.6} parent=27 // pred_check
        %p180 = pneg %p31
      $region30: #{attention_forward.6} parent=27 // pred_check_branch
        %182 = sbr.rel (%p180) target = $region32
      $region31: #{attention_forward.6} parent=27 // pred_region
        %p183 = scmp.lt.s32.totalorder %s11, 1
        %s184 = scalar_select %p183, %s11, 1
        %s185 = smul.addr %s184, 20
        %s186 = smul.addr %s185, 8
        %s187 = scalar_lea.vmem %s0, %s186
      $region32: #{attention_forward.6} parent=27 // pred_fallthru
        _
      // Predicated region
      $region33: #{attention_forward.6} parent=27 // pred_check
        %p188 = pneg %p57
      $region34: #{attention_forward.6} parent=27 // pred_check_branch
        %190 = sbr.rel (%p188) target = $region36
      $region35: #{attention_forward.6} parent=27 // pred_region
        %p191 = scmp.lt.s32.totalorder %s11, 1
        %s192 = scalar_select %p191, %s11, 1
        %s193 = smul.addr %s192, 8
        %s194 = smul.addr %s193, 8
        %s195 = scalar_lea.vmem %s1, %s194
      $region36: #{attention_forward.6} parent=27 // pred_fallthru
        _
    $region28: #{attention_forward.6} parent=5 // pred_fallthru
      _
    %p196 = scmp.le.s32.totalorder 1, %s11
    %p197 = scmp.lt.s32.totalorder %s11, 3
    %p198 = pnand %p196, %p197
    %p199 = pneg %p198
    // Predicated region
    $region37: #{attention_forward.6} parent=5 // pred_check
      _
    $region38: #{attention_forward.6} parent=5 // pred_check_branch
      %201 = sbr.rel (%p198) target = $region40
    $region39: #{attention_forward.6} parent=5 // pred_region
      %s202 = ssub.s32 %s11, 1
      %p203 = scmp.lt.s32.totalorder %s16, 1
      %s204 = scalar_select %p203, %s16, 1
      %s205 = smul.addr %s204, 20
      %s206 = smul.addr %s205, 8
      %s207 = scalar_lea.vmem %s0, %s206
      %p208 = pneg %p37
      %p209 = pneg %p34
      %p210 = scmp.lt.s32.totalorder %s16, 1
      %s211 = scalar_select %p210, %s16, 1
      %s212 = smul.addr %s211, 8
      %s213 = smul.addr %s212, 8
      %s214 = scalar_lea.vmem %s1, %s213
      %p215 = pneg %p63
      %p216 = pneg %p60
      %p217 = pneg %p84
      %p218 = pneg %p81
      %p219 = pneg %p105
      %p220 = pneg %p102
      %p221 = pneg %p126
      %p222 = pneg %p123
      %p223 = pneg %p152
      %p224 = pneg %p149
      %p225 = scmp.lt.s32.totalorder %s16, 1
      %s226 = scalar_select %p225, %s16, 1
      %s227 = smul.addr %s226, 8
      %s228 = smul.addr %s227, 8
      %s229 = scalar_lea.vmem %s5, %s228
      %p230 = scmp.lt.s32.totalorder %s16, 1
      %s231 = scalar_select %p230, %s16, 1
      %s232 = smul.addr %s231, 20
      %s233 = smul.addr %s232, 8
      %s234 = scalar_lea.vmem %s0, %s233
      %p235 = scmp.lt.s32.totalorder %s16, 1
      %s236 = scalar_select %p235, %s16, 1
      %s237 = smul.addr %s236, 8
      %s238 = smul.addr %s237, 8
      %s239 = scalar_lea.vmem %s1, %s238
      %p240 = scmp.lt.s32.totalorder %s16, 1
      %s241 = scalar_select %p240, %s16, 1
      %s242 = smul.addr %s241, 8
      %s243 = smul.addr %s242, 8
      %s244 = scalar_lea.vmem %s5, %s243
      %v245 = vld [vmem:[%s234] sm:$0xff]
      %v246 = vld [vmem:[%s234 + $0x8] sm:$0x3]
      %v247 = vld [vmem:[%s234 + $0x10] sm:$0xff]
      %v248 = vld [vmem:[%s234 + $0x18] sm:$0x3]
      %v249 = vld [vmem:[%s234 + $0x20] sm:$0xff]
      %v250 = vld [vmem:[%s234 + $0x28] sm:$0x3]
      %v251 = vld [vmem:[%s234 + $0x30] sm:$0xff]
      %v252 = vld [vmem:[%s234 + $0x38] sm:$0x3]
      %v253 = vld [vmem:[%s234 + $0x40] sm:$0xff]
      %v254 = vld [vmem:[%s234 + $0x48] sm:$0x3]
      %v255 = vld [vmem:[%s234 + $0x50] sm:$0xff]
      %v256 = vld [vmem:[%s234 + $0x58] sm:$0x3]
      %v257 = vld [vmem:[%s234 + $0x60] sm:$0xff]
      %v258 = vld [vmem:[%s234 + $0x68] sm:$0x3]
      %v259 = vld [vmem:[%s234 + $0x70] sm:$0xff]
      %v260 = vld [vmem:[%s234 + $0x78] sm:$0x3]
      %v261 = vld [vmem:[%s234 + $0x80] sm:$0xff]
      %v262 = vld [vmem:[%s234 + $0x88] sm:$0x3]
      %v263 = vld [vmem:[%s234 + $0x90] sm:$0xff]
      %v264 = vld [vmem:[%s234 + $0x98] sm:$0x3]
      %v265 = vld [vmem:[%s2] sm:$0x7]
      %v266 = vld [vmem:[%s2 + $0x4] sm:$0x7]
      %v267 = vld [vmem:[%s2 + $0x8] sm:$0x7]
      %v268 = vperm.slane %v265, 0
      %v269 = vmul.f32 %v245, %v268
      %v270 = vmul.f32 %v247, %v268
      %v271 = vmul.f32 %v249, %v268
      %v272 = vmul.f32 %v251, %v268
      %v273 = vmul.f32 %v253, %v268
      %v274 = vmul.f32 %v255, %v268
      %v275 = vmul.f32 %v257, %v268
      %v276 = vmul.f32 %v259, %v268
      %v277 = vperm.slane %v265, 1
      %v278 = vmul.f32 %v245, %v277
      %v279 = vmul.f32 %v246, %v277
      %v280 = vmul.f32 %v247, %v277
      %v281 = vmul.f32 %v248, %v277
      %v282 = vmul.f32 %v249, %v277
      %v283 = vmul.f32 %v250, %v277
      %v284 = vmul.f32 %v251, %v277
      %v285 = vmul.f32 %v252, %v277
      %v286 = vmul.f32 %v253, %v277
      %v287 = vmul.f32 %v254, %v277
      %v288 = vmul.f32 %v255, %v277
      %v289 = vmul.f32 %v256, %v277
      %v290 = vmul.f32 %v257, %v277
      %v291 = vmul.f32 %v258, %v277
      %v292 = vmul.f32 %v259, %v277
      %v293 = vmul.f32 %v260, %v277
      %vm310 = vcmask 1046528
      %v311 = vrot.slane %v278, 1
      %v312 = vrot.slane %v279, 1
      %v313 = vsel %vm310, %v311, %v312
      %v314 = vrot.slane %v280, 1
      %v315 = vrot.slane %v281, 1
      %v316 = vsel %vm310, %v314, %v315
      %v317 = vrot.slane %v282, 1
      %v318 = vrot.slane %v283, 1
      %v319 = vsel %vm310, %v317, %v318
      %v320 = vrot.slane %v284, 1
      %v321 = vrot.slane %v285, 1
      %v322 = vsel %vm310, %v320, %v321
      %v323 = vrot.slane %v286, 1
      %v324 = vrot.slane %v287, 1
      %v325 = vsel %vm310, %v323, %v324
      %v326 = vrot.slane %v288, 1
      %v327 = vrot.slane %v289, 1
      %v328 = vsel %vm310, %v326, %v327
      %v329 = vrot.slane %v290, 1
      %v330 = vrot.slane %v291, 1
      %v331 = vsel %vm310, %v329, %v330
      %v332 = vrot.slane %v292, 1
      %v333 = vrot.slane %v293, 1
      %v334 = vsel %vm310, %v332, %v333
      %v343 = vadd.f32 %v269, %v313
      %v344 = vadd.f32 %v270, %v316
      %v345 = vadd.f32 %v271, %v319
      %v346 = vadd.f32 %v272, %v322
      %v347 = vadd.f32 %v273, %v325
      %v348 = vadd.f32 %v274, %v328
      %v349 = vadd.f32 %v275, %v331
      %v350 = vadd.f32 %v276, %v334
      %v351 = vperm.slane %v265, 2
      %v352 = vmul.f32 %v245, %v351
      %v353 = vmul.f32 %v246, %v351
      %v354 = vmul.f32 %v247, %v351
      %v355 = vmul.f32 %v248, %v351
      %v356 = vmul.f32 %v249, %v351
      %v357 = vmul.f32 %v250, %v351
      %v358 = vmul.f32 %v251, %v351
      %v359 = vmul.f32 %v252, %v351
      %v360 = vmul.f32 %v253, %v351
      %v361 = vmul.f32 %v254, %v351
      %v362 = vmul.f32 %v255, %v351
      %v363 = vmul.f32 %v256, %v351
      %v364 = vmul.f32 %v257, %v351
      %v365 = vmul.f32 %v258, %v351
      %v366 = vmul.f32 %v259, %v351
      %v367 = vmul.f32 %v260, %v351
      %vm384 = vcmask 1045504
      %v385 = vrot.slane %v352, 2
      %v386 = vrot.slane %v353, 2
      %v387 = vsel %vm384, %v385, %v386
      %v388 = vrot.slane %v354, 2
      %v389 = vrot.slane %v355, 2
      %v390 = vsel %vm384, %v388, %v389
      %v391 = vrot.slane %v356, 2
      %v392 = vrot.slane %v357, 2
      %v393 = vsel %vm384, %v391, %v392
      %v394 = vrot.slane %v358, 2
      %v395 = vrot.slane %v359, 2
      %v396 = vsel %vm384, %v394, %v395
      %v397 = vrot.slane %v360, 2
      %v398 = vrot.slane %v361, 2
      %v399 = vsel %vm384, %v397, %v398
      %v400 = vrot.slane %v362, 2
      %v401 = vrot.slane %v363, 2
      %v402 = vsel %vm384, %v400, %v401
      %v403 = vrot.slane %v364, 2
      %v404 = vrot.slane %v365, 2
      %v405 = vsel %vm384, %v403, %v404
      %v406 = vrot.slane %v366, 2
      %v407 = vrot.slane %v367, 2
      %v408 = vsel %vm384, %v406, %v407
      %v417 = vadd.f32 %v343, %v387
      %v418 = vadd.f32 %v344, %v390
      %v419 = vadd.f32 %v345, %v393
      %v420 = vadd.f32 %v346, %v396
      %v421 = vadd.f32 %v347, %v399
      %v422 = vadd.f32 %v348, %v402
      %v423 = vadd.f32 %v349, %v405
      %v424 = vadd.f32 %v350, %v408
      %v425 = vperm.slane %v266, 0
      %v426 = vmul.f32 %v247, %v425
      %v427 = vmul.f32 %v249, %v425
      %v428 = vmul.f32 %v251, %v425
      %v429 = vmul.f32 %v253, %v425
      %v430 = vmul.f32 %v255, %v425
      %v431 = vmul.f32 %v257, %v425
      %v432 = vmul.f32 %v259, %v425
      %v433 = vmul.f32 %v261, %v425
      %v434 = vadd.f32 %v417, %v426
      %v435 = vadd.f32 %v418, %v427
      %v436 = vadd.f32 %v419, %v428
      %v437 = vadd.f32 %v420, %v429
      %v438 = vadd.f32 %v421, %v430
      %v439 = vadd.f32 %v422, %v431
      %v440 = vadd.f32 %v423, %v432
      %v441 = vadd.f32 %v424, %v433
      %v442 = vperm.slane %v266, 1
      %v443 = vmul.f32 %v247, %v442
      %v444 = vmul.f32 %v248, %v442
      %v445 = vmul.f32 %v249, %v442
      %v446 = vmul.f32 %v250, %v442
      %v447 = vmul.f32 %v251, %v442
      %v448 = vmul.f32 %v252, %v442
      %v449 = vmul.f32 %v253, %v442
      %v450 = vmul.f32 %v254, %v442
      %v451 = vmul.f32 %v255, %v442
      %v452 = vmul.f32 %v256, %v442
      %v453 = vmul.f32 %v257, %v442
      %v454 = vmul.f32 %v258, %v442
      %v455 = vmul.f32 %v259, %v442
      %v456 = vmul.f32 %v260, %v442
      %v457 = vmul.f32 %v261, %v442
      %v458 = vmul.f32 %v262, %v442
      %v475 = vrot.slane %v443, 1
      %v476 = vrot.slane %v444, 1
      %v477 = vsel %vm310, %v475, %v476
      %v478 = vrot.slane %v445, 1
      %v479 = vrot.slane %v446, 1
      %v480 = vsel %vm310, %v478, %v479
      %v481 = vrot.slane %v447, 1
      %v482 = vrot.slane %v448, 1
      %v483 = vsel %vm310, %v481, %v482
      %v484 = vrot.slane %v449, 1
      %v485 = vrot.slane %v450, 1
      %v486 = vsel %vm310, %v484, %v485
      %v487 = vrot.slane %v451, 1
      %v488 = vrot.slane %v452, 1
      %v489 = vsel %vm310, %v487, %v488
      %v490 = vrot.slane %v453, 1
      %v491 = vrot.slane %v454, 1
      %v492 = vsel %vm310, %v490, %v491
      %v493 = vrot.slane %v455, 1
      %v494 = vrot.slane %v456, 1
      %v495 = vsel %vm310, %v493, %v494
      %v496 = vrot.slane %v457, 1
      %v497 = vrot.slane %v458, 1
      %v498 = vsel %vm310, %v496, %v497
      %v507 = vadd.f32 %v434, %v477
      %v508 = vadd.f32 %v435, %v480
      %v509 = vadd.f32 %v436, %v483
      %v510 = vadd.f32 %v437, %v486
      %v511 = vadd.f32 %v438, %v489
      %v512 = vadd.f32 %v439, %v492
      %v513 = vadd.f32 %v440, %v495
      %v514 = vadd.f32 %v441, %v498
      %v515 = vperm.slane %v266, 2
      %v516 = vmul.f32 %v247, %v515
      %v517 = vmul.f32 %v248, %v515
      %v518 = vmul.f32 %v249, %v515
      %v519 = vmul.f32 %v250, %v515
      %v520 = vmul.f32 %v251, %v515
      %v521 = vmul.f32 %v252, %v515
      %v522 = vmul.f32 %v253, %v515
      %v523 = vmul.f32 %v254, %v515
      %v524 = vmul.f32 %v255, %v515
      %v525 = vmul.f32 %v256, %v515
      %v526 = vmul.f32 %v257, %v515
      %v527 = vmul.f32 %v258, %v515
      %v528 = vmul.f32 %v259, %v515
      %v529 = vmul.f32 %v260, %v515
      %v530 = vmul.f32 %v261, %v515
      %v531 = vmul.f32 %v262, %v515
      %v548 = vrot.slane %v516, 2
      %v549 = vrot.slane %v517, 2
      %v550 = vsel %vm384, %v548, %v549
      %v551 = vrot.slane %v518, 2
      %v552 = vrot.slane %v519, 2
      %v553 = vsel %vm384, %v551, %v552
      %v554 = vrot.slane %v520, 2
      %v555 = vrot.slane %v521, 2
      %v556 = vsel %vm384, %v554, %v555
      %v557 = vrot.slane %v522, 2
      %v558 = vrot.slane %v523, 2
      %v559 = vsel %vm384, %v557, %v558
      %v560 = vrot.slane %v524, 2
      %v561 = vrot.slane %v525, 2
      %v562 = vsel %vm384, %v560, %v561
      %v563 = vrot.slane %v526, 2
      %v564 = vrot.slane %v527, 2
      %v565 = vsel %vm384, %v563, %v564
      %v566 = vrot.slane %v528, 2
      %v567 = vrot.slane %v529, 2
      %v568 = vsel %vm384, %v566, %v567
      %v569 = vrot.slane %v530, 2
      %v570 = vrot.slane %v531, 2
      %v571 = vsel %vm384, %v569, %v570
      %v580 = vadd.f32 %v507, %v550
      %v581 = vadd.f32 %v508, %v553
      %v582 = vadd.f32 %v509, %v556
      %v583 = vadd.f32 %v510, %v559
      %v584 = vadd.f32 %v511, %v562
      %v585 = vadd.f32 %v512, %v565
      %v586 = vadd.f32 %v513, %v568
      %v587 = vadd.f32 %v514, %v571
      %v588 = vperm.slane %v267, 0
      %v589 = vmul.f32 %v249, %v588
      %v590 = vmul.f32 %v251, %v588
      %v591 = vmul.f32 %v253, %v588
      %v592 = vmul.f32 %v255, %v588
      %v593 = vmul.f32 %v257, %v588
      %v594 = vmul.f32 %v259, %v588
      %v595 = vmul.f32 %v261, %v588
      %v596 = vmul.f32 %v263, %v588
      %v597 = vadd.f32 %v580, %v589
      %v598 = vadd.f32 %v581, %v590
      %v599 = vadd.f32 %v582, %v591
      %v600 = vadd.f32 %v583, %v592
      %v601 = vadd.f32 %v584, %v593
      %v602 = vadd.f32 %v585, %v594
      %v603 = vadd.f32 %v586, %v595
      %v604 = vadd.f32 %v587, %v596
      %v605 = vperm.slane %v267, 1
      %v606 = vmul.f32 %v249, %v605
      %v607 = vmul.f32 %v250, %v605
      %v608 = vmul.f32 %v251, %v605
      %v609 = vmul.f32 %v252, %v605
      %v610 = vmul.f32 %v253, %v605
      %v611 = vmul.f32 %v254, %v605
      %v612 = vmul.f32 %v255, %v605
      %v613 = vmul.f32 %v256, %v605
      %v614 = vmul.f32 %v257, %v605
      %v615 = vmul.f32 %v258, %v605
      %v616 = vmul.f32 %v259, %v605
      %v617 = vmul.f32 %v260, %v605
      %v618 = vmul.f32 %v261, %v605
      %v619 = vmul.f32 %v262, %v605
      %v620 = vmul.f32 %v263, %v605
      %v621 = vmul.f32 %v264, %v605
      %v638 = vrot.slane %v606, 1
      %v639 = vrot.slane %v607, 1
      %v640 = vsel %vm310, %v638, %v639
      %v641 = vrot.slane %v608, 1
      %v642 = vrot.slane %v609, 1
      %v643 = vsel %vm310, %v641, %v642
      %v644 = vrot.slane %v610, 1
      %v645 = vrot.slane %v611, 1
      %v646 = vsel %vm310, %v644, %v645
      %v647 = vrot.slane %v612, 1
      %v648 = vrot.slane %v613, 1
      %v649 = vsel %vm310, %v647, %v648
      %v650 = vrot.slane %v614, 1
      %v651 = vrot.slane %v615, 1
      %v652 = vsel %vm310, %v650, %v651
      %v653 = vrot.slane %v616, 1
      %v654 = vrot.slane %v617, 1
      %v655 = vsel %vm310, %v653, %v654
      %v656 = vrot.slane %v618, 1
      %v657 = vrot.slane %v619, 1
      %v658 = vsel %vm310, %v656, %v657
      %v659 = vrot.slane %v620, 1
      %v660 = vrot.slane %v621, 1
      %v661 = vsel %vm310, %v659, %v660
      %v670 = vadd.f32 %v597, %v640
      %v671 = vadd.f32 %v598, %v643
      %v672 = vadd.f32 %v599, %v646
      %v673 = vadd.f32 %v600, %v649
      %v674 = vadd.f32 %v601, %v652
      %v675 = vadd.f32 %v602, %v655
      %v676 = vadd.f32 %v603, %v658
      %v677 = vadd.f32 %v604, %v661
      %v678 = vperm.slane %v267, 2
      %v679 = vmul.f32 %v249, %v678
      %v680 = vmul.f32 %v250, %v678
      %v681 = vmul.f32 %v251, %v678
      %v682 = vmul.f32 %v252, %v678
      %v683 = vmul.f32 %v253, %v678
      %v684 = vmul.f32 %v254, %v678
      %v685 = vmul.f32 %v255, %v678
      %v686 = vmul.f32 %v256, %v678
      %v687 = vmul.f32 %v257, %v678
      %v688 = vmul.f32 %v258, %v678
      %v689 = vmul.f32 %v259, %v678
      %v690 = vmul.f32 %v260, %v678
      %v691 = vmul.f32 %v261, %v678
      %v692 = vmul.f32 %v262, %v678
      %v693 = vmul.f32 %v263, %v678
      %v694 = vmul.f32 %v264, %v678
      %v711 = vrot.slane %v679, 2
      %v712 = vrot.slane %v680, 2
      %v713 = vsel %vm384, %v711, %v712
      %v714 = vrot.slane %v681, 2
      %v715 = vrot.slane %v682, 2
      %v716 = vsel %vm384, %v714, %v715
      %v717 = vrot.slane %v683, 2
      %v718 = vrot.slane %v684, 2
      %v719 = vsel %vm384, %v717, %v718
      %v720 = vrot.slane %v685, 2
      %v721 = vrot.slane %v686, 2
      %v722 = vsel %vm384, %v720, %v721
      %v723 = vrot.slane %v687, 2
      %v724 = vrot.slane %v688, 2
      %v725 = vsel %vm384, %v723, %v724
      %v726 = vrot.slane %v689, 2
      %v727 = vrot.slane %v690, 2
      %v728 = vsel %vm384, %v726, %v727
      %v729 = vrot.slane %v691, 2
      %v730 = vrot.slane %v692, 2
      %v731 = vsel %vm384, %v729, %v730
      %v732 = vrot.slane %v693, 2
      %v733 = vrot.slane %v694, 2
      %v734 = vsel %vm384, %v732, %v733
      %v743 = vadd.f32 %v670, %v713
      %v744 = vadd.f32 %v671, %v716
      %v745 = vadd.f32 %v672, %v719
      %v746 = vadd.f32 %v673, %v722
      %v747 = vadd.f32 %v674, %v725
      %v748 = vadd.f32 %v675, %v728
      %v749 = vadd.f32 %v676, %v731
      %v750 = vadd.f32 %v677, %v734
      %v751 = vld [vmem:[%s3] sm:$0x1]
      %v753 = vperm.slane %v751, 0
      %v755 = vmul.f32 %v743, %v753
      %v756 = vmul.f32 %v744, %v753
      %v757 = vmul.f32 %v745, %v753
      %v758 = vmul.f32 %v746, %v753
      %v759 = vmul.f32 %v747, %v753
      %v760 = vmul.f32 %v748, %v753
      %v761 = vmul.f32 %v749, %v753
      %v762 = vmul.f32 %v750, %v753
      %v763 = vld [vmem:[%s4] sm:$0x1]
      %v765 = vperm.slane %v763, 0
      %v767 = vadd.f32 %v755, %v765
      %v768 = vadd.f32 %v756, %v765
      %v769 = vadd.f32 %v757, %v765
      %v770 = vadd.f32 %v758, %v765
      %v771 = vadd.f32 %v759, %v765
      %v772 = vadd.f32 %v760, %v765
      %v773 = vadd.f32 %v761, %v765
      %v774 = vadd.f32 %v762, %v765
      %v775 = vld [vmem:[%s239] sm:$0xff]
      %v776 = vld [vmem:[%s239 + $0x8] sm:$0xff]
      %v777 = vld [vmem:[%s239 + $0x10] sm:$0xff]
      %v778 = vld [vmem:[%s239 + $0x18] sm:$0xff]
      %v779 = vld [vmem:[%s239 + $0x20] sm:$0xff]
      %v780 = vld [vmem:[%s239 + $0x28] sm:$0xff]
      %v781 = vld [vmem:[%s239 + $0x30] sm:$0xff]
      %v782 = vld [vmem:[%s239 + $0x38] sm:$0xff]
      %v783 = vadd.f32 %v767, %v775
      %v784 = vadd.f32 %v768, %v776
      %v785 = vadd.f32 %v769, %v777
      %v786 = vadd.f32 %v770, %v778
      %v787 = vadd.f32 %v771, %v779
      %v788 = vadd.f32 %v772, %v780
      %v789 = vadd.f32 %v773, %v781
      %v790 = vadd.f32 %v774, %v782
      %vm791 = vcmask 523264
      %792 = vst.msk [vmem:[%s244] sm:$0xff] %vm791, %v783
      %793 = vst.msk [vmem:[%s244 + $0x8] sm:$0xff] %vm791, %v784
      %794 = vst.msk [vmem:[%s244 + $0x10] sm:$0xff] %vm791, %v785
      %795 = vst.msk [vmem:[%s244 + $0x18] sm:$0xff] %vm791, %v786
      %796 = vst.msk [vmem:[%s244 + $0x20] sm:$0xff] %vm791, %v787
      %797 = vst.msk [vmem:[%s244 + $0x28] sm:$0xff] %vm791, %v788
      %798 = vst.msk [vmem:[%s244 + $0x30] sm:$0xff] %vm791, %v789
      %799 = vst.msk [vmem:[%s244 + $0x38] sm:$0xff] %vm791, %v790
      %p800 = scmp.lt.s32.totalorder %s16, 1
      %s801 = scalar_select %p800, %s16, 1
      %s802 = smul.addr %s801, 8
      %s803 = smul.addr %s802, 8
      %s804 = scalar_lea.vmem %s5, %s803
      // Predicated region
      $region41: #{attention_forward.6} parent=39 // pred_check
        %p805 = pneg %p149
      $region42: #{attention_forward.6} parent=39 // pred_check_branch
        %807 = sbr.rel (%p805) target = $region44
      $region43: #{attention_forward.6} parent=39 // pred_region
        _
      $region44: #{attention_forward.6} parent=39 // pred_fallthru
        _
    $region40: #{attention_forward.6} parent=5 // pred_fallthru
      _
    %p808 = scmp.le.s32.totalorder 2, %s11
    // Predicated region
    $region45: #{attention_forward.6} parent=5 // pred_check
      %p809 = pneg %p808
    $region46: #{attention_forward.6} parent=5 // pred_check_branch
      %811 = sbr.rel (%p809) target = $region48
    $region47: #{attention_forward.6} parent=5 // pred_region
      %s812 = ssub.s32 %s11, 2
      // Predicated region
      $region49: #{attention_forward.6} parent=47 // pred_check
        %p813 = pneg %p155
      $region50: #{attention_forward.6} parent=47 // pred_check_branch
        %815 = sbr.rel (%p813) target = $region52
      $region51: #{attention_forward.6} parent=47 // pred_region
        %p816 = scmp.lt.s32.totalorder %s17, 1
        %s817 = scalar_select %p816, %s17, 1
        %s818 = smul.addr %s817, 8
        %s819 = smul.addr %s818, 8
        %s820 = scalar_lea.vmem %s5, %s819
      $region52: #{attention_forward.6} parent=47 // pred_fallthru
        _
    $region48: #{attention_forward.6} parent=5 // pred_fallthru
      _
  $region6: #{attention_forward.6} parent=0 // loop_footer
    %s15 = sadd.s32 1, %s11
  $region7: #{attention_forward.6} parent=0 // loop_footer_branch
    %10 = sbr.rel target = $region3
  $region8: #{attention_forward.6} parent=0 // loop_exit
    _

</llo_original>
